<compile_context>
chip_gen: v7x
topology: tpu7x:2x2x1
jax: 0.10.0
libtpu: 0.0.40
codegen_flags: <defaults>
</compile_context>

<pallas_src>
import functools

import jax
import jax.numpy as jnp
import numpy as np
from jax.experimental import pallas as pl
from jax.experimental.pallas import tpu as pltpu

_ROW_ALIGN = 16          # sublane alignment safe for both f32 (8) and bf16 (16) blocks


# ----------------------------- hardware-derived budgets ---------------------

def _derive_vmem_limit():
    """Scoped-VMEM budget: ~75% of physical (96 MiB on v5e/v6e, 48 MiB on v7x)."""
    cap = 64 << 20
    try:
        info = pltpu.get_tpu_info()
        got = int(getattr(info, "vmem_capacity_bytes", 0) or 0)
        if got > 0:
            cap = got
    except Exception:
        pass
    return max(32 << 20, (cap * 3) // 4)


_VMEM_LIMIT = _derive_vmem_limit()
_ROW_TARGET = 1024 if _VMEM_LIMIT >= (80 << 20) else 512   # bigger M tiles on 128 MiB parts

_UNSET = object()
_WEIGHT_PIPELINE_MODE = _UNSET


def _weight_pipeline_mode():
    """pl.Buffered(1) for grid-constant weight blocks, if this runtime supports it."""
    global _WEIGHT_PIPELINE_MODE
    if _WEIGHT_PIPELINE_MODE is not _UNSET:
        return _WEIGHT_PIPELINE_MODE
    mode = None
    try:
        try:
            cand = pl.Buffered(1)
        except TypeError:
            cand = pl.Buffered(buffer_count=1)

        def _probe(x_ref, w_ref, o_ref):
            o_ref[...] = x_ref[...] + w_ref[...]

        out = pl.pallas_call(
            _probe,
            out_shape=jax.ShapeDtypeStruct((16, 128), jnp.float32),
            grid=(2,),
            in_specs=[pl.BlockSpec((8, 128), lambda i: (i, 0)),
                      pl.BlockSpec((8, 128), lambda i: (0, 0), pipeline_mode=cand)],
            out_specs=pl.BlockSpec((8, 128), lambda i: (i, 0)),
        )(jnp.zeros((16, 128), jnp.float32), jnp.zeros((8, 128), jnp.float32))
        jax.block_until_ready(out)
        mode = cand
    except Exception:
        mode = None
    _WEIGHT_PIPELINE_MODE = mode
    return mode


# ----------------------------- shared math ---------------------------------

def _layernorm(x, gamma, beta, eps=1e-5):
    mu = jnp.mean(x, axis=-1, keepdims=True)
    var = jnp.mean((x - mu) ** 2, axis=-1, keepdims=True)
    return (x - mu) * jax.lax.rsqrt(var + eps) * gamma + beta


# ----------------------------- Pallas kernels -------------------------------

def _mha_merged(x1n, x2n, wq, bq, wk, bk, wv, bv, wo, bo, *,
                n_heads, d_head, n1, n2, bb, causal):
    """Multi-head attention on flattened, LayerNormed f32 activations.

    x1n: [bb*n1, d_model] (queries), x2n: [bb*n2, d_model] (keys/values), weights bf16.
    Returns [bb*n1, d_model] f32 (pre-residual).  Groups are ordered g = h*bb + b so the head
    split is only H lane slices (+ free leading reshape) and the merge is one H-way lane concat.
    """
    H, dh = n_heads, d_head
    bf16 = jnp.bfloat16
    scale = 1.0 / float(np.sqrt(d_head))

    # Q/K/V projections: M = bb*seq rows, bf16 operands, f32 accumulation.
    q = (jnp.dot(x1n.astype(bf16), wq, preferred_element_type=jnp.float32) + bq) * scale
    k = jnp.dot(x2n.astype(bf16), wk, preferred_element_type=jnp.float32) + bk
    v = jnp.dot(x2n.astype(bf16), wv, preferred_element_type=jnp.float32) + bv

    def split_heads(t, n):
        # [bb*n, H*dh] -> [H*bb, n, dh] with group g = h*bb + b (only H lane slices).
        return jnp.concatenate(
            [t[:, h * dh:(h + 1) * dh].reshape(bb, n, dh) for h in range(H)], axis=0)

    qs = split_heads(q, n1)                              # [G, n1, dh]
    ks = split_heads(k, n2)                              # [G, n2, dh]
    vs = split_heads(v, n2)                              # [G, n2, dh]

    # Scores: one batched contraction over all (head, batch) groups; bf16 operands.
    s = jnp.einsum('gqd,gkd->gqk', qs.astype(bf16), ks.astype(bf16),
                   preferred_element_type=jnp.float32)

    if causal:
        row = jax.lax.broadcasted_iota(jnp.int32, (n1, n2), 0)
        col = jax.lax.broadcasted_iota(jnp.int32, (n1, n2), 1)
        s = jnp.where((col > row)[None, :, :], -1e30, s)

    s = s - jnp.max(s, axis=-1, keepdims=True)
    p = jnp.exp(s)
    p = p / jnp.sum(p, axis=-1, keepdims=True)           # exact f32 normalization

    o = jnp.einsum('gqk,gkd->gqd', p.astype(bf16), vs.astype(bf16),
                   preferred_element_type=jnp.float32)   # [G, n1, dh]

    # Merge heads back into the lane dim with a single H-way concat:
    # [H*bb, n1, dh] -> [bb*n1, H*dh].
    att = jnp.concatenate(
        [o[h * bb:(h + 1) * bb].reshape(bb * n1, dh) for h in range(H)], axis=-1)

    # Single full-K output projection.
    return jnp.dot(att.astype(bf16), wo, preferred_element_type=jnp.float32) + bo


def self_attention_kernel(x_ref, g_ref, b_ref, wq_ref, bq_ref, wk_ref, bk_ref,
                          wv_ref, bv_ref, wo_ref, bo_ref, o_ref, *,
                          n_heads, d_head, seq_len, bb, causal):
    """Fused LayerNorm -> QKV -> (causal) attention -> out proj -> +residual (bf16 stream)."""
    x = x_ref[...].astype(jnp.float32)                   # [bb*seq, d_model]
    xn = _layernorm(x, g_ref[...], b_ref[...])
    att = _mha_merged(xn, xn,
                      wq_ref[...], bq_ref[...], wk_ref[...], bk_ref[...],
                      wv_ref[...], bv_ref[...], wo_ref[...], bo_ref[...],
                      n_heads=n_heads, d_head=d_head, n1=seq_len, n2=seq_len,
                      bb=bb, causal=causal)
    o_ref[...] = (x + att).astype(o_ref.dtype)           # fused residual add, bf16 store


def cross_attention_kernel(x1_ref, x2_ref, g1_ref, b1_ref, g2_ref, b2_ref,
                           wq_ref, bq_ref, wk_ref, bk_ref, wv_ref, bv_ref,
                           wo_ref, bo_ref, o_ref, *, n_heads, d_head, n1, n2, bb):
    x1 = x1_ref[...].astype(jnp.float32)                 # [bb*n1, d_model]
    x2 = x2_ref[...].astype(jnp.float32)                 # [bb*n2, d_model]
    x1n = _layernorm(x1, g1_ref[...], b1_ref[...])
    x2n = _layernorm(x2, g2_ref[...], b2_ref[...])
    att = _mha_merged(x1n, x2n,
                      wq_ref[...], bq_ref[...], wk_ref[...], bk_ref[...],
                      wv_ref[...], bv_ref[...], wo_ref[...], bo_ref[...],
                      n_heads=n_heads, d_head=d_head, n1=n1, n2=n2,
                      bb=bb, causal=False)
    o_ref[...] = (x1 + att).astype(o_ref.dtype)


def ff_kernel(x_ref, g_ref, bn_ref, w1_ref, b1_ref, w2_ref, b2_ref, o_ref):
    """Fused LayerNorm -> Linear -> ReLU -> Linear -> +residual on an M-tile of rows."""
    bf16 = jnp.bfloat16
    x = x_ref[...].astype(jnp.float32)                   # [tm, d_model]
    xn = _layernorm(x, g_ref[...], bn_ref[...])
    h = jnp.dot(xn.astype(bf16), w1_ref[...], preferred_element_type=jnp.float32) + b1_ref[...]
    h = jnp.maximum(h, 0.0)
    y = jnp.dot(h.astype(bf16), w2_ref[...], preferred_element_type=jnp.float32) + b2_ref[...]
    o_ref[...] = (x + y).astype(o_ref.dtype)


def linear_kernel(x_ref, w_ref, b_ref, o_ref):
    """Final vocab projection on an (M-tile, N-tile) block; bf16 operands, f32 logits."""
    o = jnp.dot(x_ref[...], w_ref[...], preferred_element_type=jnp.float32) + b_ref[...]
    o_ref[...] = o.astype(o_ref.dtype)


# ----------------------------- tiling helpers -------------------------------

def _batch_tile(b, n, target_rows, min_steps=2):
    """Largest divisor bb of b with bb*n <= target_rows and 16-row alignment (or full batch);
    prefers leaving >= min_steps grid steps so v7x's two TensorCores both get work."""
    valid = []
    for bb in range(1, b + 1):
        if b % bb:
            continue
        rows = bb * n
        if rows > target_rows:
            continue
        if rows % _ROW_ALIGN and bb != b:
            continue
        valid.append(bb)
    if not valid:
        return 1
    pref = [bb for bb in valid if b // bb >= min_steps]
    return max(pref) if pref else max(valid)


def _row_tile(m, target, min_steps=2):
    """M tile: 16-row-aligned divisor of m up to `target` (prefer >=2 steps), else full."""
    valid = []
    t = _ROW_ALIGN
    while t <= min(m, target):
        if m % t == 0:
            valid.append(t)
        t += _ROW_ALIGN
    if m <= target:
        valid.append(m)                                  # full extent is always layout-legal
    if not valid:
        return m
    pref = [t for t in valid if m // t >= min_steps]
    return max(pref) if pref else max(valid)


def _col_tile(v, target=2048):
    """N tile for the vocab projection: full if small, else a 128-multiple divisor."""
    if v <= target:
        return v
    t = (target // 128) * 128
    while t >= 128:
        if v % t == 0:
            return t
        t -= 128
    return v


def _rep_spec(a):
    """Full-array block replicated to every step of a 1-D grid (weights / LN params).
    Single-buffered (pl.Buffered(1)) when supported: the block never changes across steps."""
    zeros = (0,) * a.ndim
    idx = lambda i, _z=zeros: _z
    mode = _weight_pipeline_mode()
    if mode is not None:
        return pl.BlockSpec(a.shape, idx, pipeline_mode=mode)
    return pl.BlockSpec(a.shape, idx)


def _compiler_params(n_grid_axes):
    return pltpu.CompilerParams(
        dimension_semantics=("parallel",) * n_grid_axes,
        vmem_limit_bytes=_VMEM_LIMIT)


# ----------------------------- Pallas wrappers ------------------------------

def self_attention_pallas(x, p, causal):
    b, n, d = x.shape
    bb = _batch_tile(b, n, _ROW_TARGET)
    rows = bb * n
    xf = x.reshape(b * n, d)                             # batch folded into MXU M rows
    kern = functools.partial(self_attention_kernel,
                             n_heads=p['n_heads'], d_head=p['d_head'],
                             seq_len=n, bb=bb, causal=causal)
    args = (xf, p['g'], p['b'], p['wq'], p['bq'], p['wk'], p['bk'],
            p['wv'], p['bv'], p['wo'], p['bo'])
    in_specs = [pl.BlockSpec((rows, d), lambda i: (i, 0))] + [_rep_spec(a) for a in args[1:]]
    out = pl.pallas_call(
        kern,
        out_shape=jax.ShapeDtypeStruct((b * n, d), jnp.bfloat16),
        grid=(b // bb,),
        in_specs=in_specs,
        out_specs=pl.BlockSpec((rows, d), lambda i: (i, 0)),
        compiler_params=_compiler_params(1),
    )(*args)
    return out.reshape(b, n, d)


def cross_attention_pallas(x1, x2, p):
    b, n1, d = x1.shape
    n2 = x2.shape[1]
    bb = _batch_tile(b, max(n1, n2), _ROW_TARGET)
    x1f = x1.reshape(b * n1, d)
    x2f = x2.reshape(b * n2, d)
    kern = functools.partial(cross_attention_kernel,
                             n_heads=p['n_heads'], d_head=p['d_head'],
                             n1=n1, n2=n2, bb=bb)
    args = (x1f, x2f, p['g1'], p['b1'], p['g2'], p['b2'],
            p['wq'], p['bq'], p['wk'], p['bk'], p['wv'], p['bv'], p['wo'], p['bo'])
    in_specs = [pl.BlockSpec((bb * n1, d), lambda i: (i, 0)),
                pl.BlockSpec((bb * n2, d), lambda i: (i, 0))] + \
               [_rep_spec(a) for a in args[2:]]
    out = pl.pallas_call(
        kern,
        out_shape=jax.ShapeDtypeStruct((b * n1, d), jnp.bfloat16),
        grid=(b // bb,),
        in_specs=in_specs,
        out_specs=pl.BlockSpec((bb * n1, d), lambda i: (i, 0)),
        compiler_params=_compiler_params(1),
    )(*args)
    return out.reshape(b, n1, d)


def ff_pallas(x, p):
    b, n, d = x.shape
    m = b * n
    tm = _row_tile(m, _ROW_TARGET)
    xf = x.reshape(m, d)
    args = (xf, p['g'], p['bn'], p['w1'], p['b1'], p['w2'], p['b2'])
    in_specs = [pl.BlockSpec((tm, d), lambda i: (i, 0))] + [_rep_spec(a) for a in args[1:]]
    out = pl.pallas_call(
        ff_kernel,
        out_shape=jax.ShapeDtypeStruct((m, d), jnp.bfloat16),
        grid=(m // tm,),
        in_specs=in_specs,
        out_specs=pl.BlockSpec((tm, d), lambda i: (i, 0)),
        compiler_params=_compiler_params(1),
    )(*args)
    return out.reshape(b, n, d)


def linear_pallas(x, w, bvec):
    b, n, d = x.shape
    m = b * n
    v = w.shape[1]
    tm = _row_tile(m, _ROW_TARGET)
    tn = _col_tile(v)
    xf = x.reshape(m, d)
    # Grid ordered (vocab, M): M is innermost, so each [d, tn] vocab-weight block is DMA'd from
    # HBM once and reused across all M tiles (weight-streaming dominates this HBM-bound matmul).
    out = pl.pallas_call(
        linear_kernel,
        out_shape=jax.ShapeDtypeStruct((m, v), jnp.float32),
        grid=(v // tn, m // tm),
        in_specs=[pl.BlockSpec((tm, d), lambda j, i: (i, 0)),
                  pl.BlockSpec((d, tn), lambda j, i: (0, j)),
                  pl.BlockSpec((1, tn), lambda j, i: (0, j))],
        out_specs=pl.BlockSpec((tm, tn), lambda j, i: (i, j)),
        compiler_params=_compiler_params(2),
    )(xf, w, bvec)
    return out.reshape(b, n, v)


# ----------------------------- pure-JAX reference ---------------------------
# Mirrors the kernels' precision policy (bf16 MXU operands, f32 accumulation/statistics,
# bf16 residual stream) so the comparison isolates kernel-logic bugs from intended numerics.

def _mm(a, w):
    return jnp.dot(a.astype(jnp.bfloat16), w.astype(jnp.bfloat16),
                   preferred_element_type=jnp.float32)


def self_attention_ref(x, p, causal):
    b, n, _ = x.shape
    H, dh = p['n_heads'], p['d_head']
    bf16 = jnp.bfloat16
    scale = 1.0 / float(np.sqrt(dh))
    x32 = x.astype(jnp.float32)
    xn = _layernorm(x32, p['g'], p['b'])
    q = ((_mm(xn, p['wq']) + p['bq']) * scale).reshape(b, n, H, dh)
    k = (_mm(xn, p['wk']) + p['bk']).reshape(b, n, H, dh)
    v = (_mm(xn, p['wv']) + p['bv']).reshape(b, n, H, dh)
    s = jnp.einsum('bihd,bjhd->bhij', q.astype(bf16), k.astype(bf16),
                   preferred_element_type=jnp.float32)
    if causal:
        mask = jnp.triu(jnp.ones((n, n), bool), k=1)
        s = jnp.where(mask[None, None], -1e30, s)
    s = s - jnp.max(s, axis=-1, keepdims=True)
    pr = jnp.exp(s)
    pr = pr / jnp.sum(pr, axis=-1, keepdims=True)
    o = jnp.einsum('bhij,bjhd->bihd', pr.astype(bf16), v.astype(bf16),
                   preferred_element_type=jnp.float32).reshape(b, n, H * dh)
    out = _mm(o, p['wo']) + p['bo']
    return (x32 + out).astype(x.dtype)


def cross_attention_ref(x1, x2, p):
    b, n1, _ = x1.shape
    n2 = x2.shape[1]
    H, dh = p['n_heads'], p['d_head']
    bf16 = jnp.bfloat16
    scale = 1.0 / float(np.sqrt(dh))
    x132 = x1.astype(jnp.float32)
    x232 = x2.astype(jnp.float32)
    x1n = _layernorm(x132, p['g1'], p['b1'])
    x2n = _layernorm(x232, p['g2'], p['b2'])
    q = ((_mm(x1n, p['wq']) + p['bq']) * scale).reshape(b, n1, H, dh)
    k = (_mm(x2n, p['wk']) + p['bk']).reshape(b, n2, H, dh)
    v = (_mm(x2n, p['wv']) + p['bv']).reshape(b, n2, H, dh)
    s = jnp.einsum('bihd,bjhd->bhij', q.astype(bf16), k.astype(bf16),
                   preferred_element_type=jnp.float32)
    s = s - jnp.max(s, axis=-1, keepdims=True)
    pr = jnp.exp(s)
    pr = pr / jnp.sum(pr, axis=-1, keepdims=True)
    o = jnp.einsum('bhij,bjhd->bihd', pr.astype(bf16), v.astype(bf16),
                   preferred_element_type=jnp.float32).reshape(b, n1, H * dh)
    out = _mm(o, p['wo']) + p['bo']
    return (x132 + out).astype(x1.dtype)


def ff_ref(x, p):
    x32 = x.astype(jnp.float32)
    xn = _layernorm(x32, p['g'], p['bn'])
    h = jnp.maximum(_mm(xn, p['w1']) + p['b1'], 0.0)
    y = _mm(h, p['w2']) + p['b2']
    return (x32 + y).astype(x.dtype)


def linear_ref(x, w, bvec):
    return _mm(x, w) + bvec


# ----------------------------- model ----------------------------------------

def forward(params, x_tok, y_tok, self_attn_fn, cross_attn_fn, ff_fn, lin_fn):
    # TODO(synk): embedding gather + positional add are left to XLA (no Pallas gather kernel).
    xe = jnp.take(params['emb'], x_tok, axis=0)                  # [b, tx, d] f32
    xe = (xe + params['enc_pos'][:, :xe.shape[1], :]).astype(jnp.bfloat16)   # bf16 residual stream
    for layer in params['enc_layers']:
        xe = self_attn_fn(xe, layer['att'], False)               # residual fused
        xe = ff_fn(xe, layer['ff'])                              # residual fused
    yd = jnp.take(params['emb'], y_tok, axis=0)                  # [b, ty, d] f32
    yd = (yd + params['dec_pos'][:, :yd.shape[1], :]).astype(jnp.bfloat16)
    for layer in params['dec_layers']:
        yd = self_attn_fn(yd, layer['self_att'], True)
        yd = cross_attn_fn(yd, xe, layer['cross_att'])
        yd = ff_fn(yd, layer['ff'])
    return lin_fn(yd, params['out_w'], params['out_b'])          # [b, ty, vocab] f32 logits


def _init_self_attn(key, d_model, n_heads, d_head):
    ks = jax.random.split(key, 10)
    hdh = n_heads * d_head
    std = 0.05
    bf16 = jnp.bfloat16
    return dict(
        n_heads=n_heads, d_head=d_head,
        g=1.0 + 0.1 * jax.random.normal(ks[0], (1, d_model)),
        b=0.1 * jax.random.normal(ks[1], (1, d_model)),
        wq=(std * jax.random.normal(ks[2], (d_model, hdh))).astype(bf16),
        bq=std * jax.random.normal(ks[3], (1, hdh)),
        wk=(std * jax.random.normal(ks[4], (d_model, hdh))).astype(bf16),
        bk=std * jax.random.normal(ks[5], (1, hdh)),
        wv=(std * jax.random.normal(ks[6], (d_model, hdh))).astype(bf16),
        bv=std * jax.random.normal(ks[7], (1, hdh)),
        wo=(std * jax.random.normal(ks[8], (hdh, d_model))).astype(bf16),
        bo=std * jax.random.normal(ks[9], (1, d_model)),
    )


def _init_cross_attn(key, d_model, n_heads, d_head):
    ks = jax.random.split(key, 12)
    hdh = n_heads * d_head
    std = 0.05
    bf16 = jnp.bfloat16
    return dict(
        n_heads=n_heads, d_head=d_head,
        g1=1.0 + 0.1 * jax.random.normal(ks[0], (1, d_model)),
        b1=0.1 * jax.random.normal(ks[1], (1, d_model)),
        g2=1.0 + 0.1 * jax.random.normal(ks[2], (1, d_model)),
        b2=0.1 * jax.random.normal(ks[3], (1, d_model)),
        wq=(std * jax.random.normal(ks[4], (d_model, hdh))).astype(bf16),
        bq=std * jax.random.normal(ks[5], (1, hdh)),
        wk=(std * jax.random.normal(ks[6], (d_model, hdh))).astype(bf16),
        bk=std * jax.random.normal(ks[7], (1, hdh)),
        wv=(std * jax.random.normal(ks[8], (d_model, hdh))).astype(bf16),
        bv=std * jax.random.normal(ks[9], (1, hdh)),
        wo=(std * jax.random.normal(ks[10], (hdh, d_model))).astype(bf16),
        bo=std * jax.random.normal(ks[11], (1, d_model)),
    )


def _init_ff(key, d_model, d_ff):
    ks = jax.random.split(key, 6)
    std = 0.05
    bf16 = jnp.bfloat16
    return dict(
        g=1.0 + 0.1 * jax.random.normal(ks[0], (1, d_model)),
        bn=0.1 * jax.random.normal(ks[1], (1, d_model)),
        w1=(std * jax.random.normal(ks[2], (d_model, d_ff))).astype(bf16),
        b1=std * jax.random.normal(ks[3], (1, d_ff)),
        w2=(std * jax.random.normal(ks[4], (d_ff, d_model))).astype(bf16),
        b2=std * jax.random.normal(ks[5], (1, d_model)),
    )


def init_params(key, *, vocab_size, seq_len, d_model, n_heads, d_head, d_ff, nb_layers):
    keys = jax.random.split(key, 6)
    params = dict(
        emb=0.1 * jax.random.normal(keys[0], (vocab_size, d_model)),
        enc_pos=0.1 * jax.random.normal(keys[1], (1, seq_len, d_model)),
        dec_pos=0.1 * jax.random.normal(keys[2], (1, seq_len, d_model)),
        out_w=(0.05 * jax.random.normal(keys[3], (d_model, vocab_size))).astype(jnp.bfloat16),
        out_b=0.05 * jax.random.normal(keys[4], (1, vocab_size)),
        enc_layers=[], dec_layers=[],
    )
    for l in range(nb_layers):
        k = jax.random.fold_in(keys[5], l)
        k_ea, k_ef, k_ds, k_dc, k_df = jax.random.split(k, 5)
        params['enc_layers'].append(dict(
            att=_init_self_attn(k_ea, d_model, n_heads, d_head),
            ff=_init_ff(k_ef, d_model, d_ff)))
        params['dec_layers'].append(dict(
            self_att=_init_self_attn(k_ds, d_model, n_heads, d_head),
            cross_att=_init_cross_attn(k_dc, d_model, n_heads, d_head),
            ff=_init_ff(k_df, d_model, d_ff)))
    return params


# ----------------------------- main ------------------------------------------

if __name__ == "__main__":
    cfg = dict(vocab_size=24, seq_len=8, d_model=32, n_heads=4, d_head=8,
               d_ff=64, nb_layers=2)
    batch = 2

    params = init_params(jax.random.PRNGKey(0), **cfg)

    kx, ky = jax.random.split(jax.random.PRNGKey(1))
    x_tok = jax.random.randint(kx, (batch, cfg['seq_len']), 0, cfg['vocab_size'], dtype=jnp.int32)
    y_tok = jax.random.randint(ky, (batch, cfg['seq_len']), 0, cfg['vocab_size'], dtype=jnp.int32)

    logits = forward(params, x_tok, y_tok,
                     self_attention_pallas, cross_attention_pallas, ff_pallas, linear_pallas)
    logits = jax.block_until_ready(logits)

    ref = forward(params, x_tok, y_tok,
                  self_attention_ref, cross_attention_ref, ff_ref, linear_ref)
    ref = jax.block_until_ready(ref)

    # Both paths use the same bf16-MXU / f32-statistics / bf16-residual precision policy, so the
    # comparison checks the Pallas plumbing (tiling, head split/merge, masking, residuals).
    np.testing.assert_allclose(np.asarray(logits), np.asarray(ref), atol=1e-2, rtol=1e-2)

    print("KERNEL_OK")
</pallas_src>

<mosaic_0001>
module attributes {stable_mosaic.version = 11 : i64} {
  func.func @_probe(%arg0: i32, %arg1: memref<8x128xf32, #tpu.memory_space<vmem>>, %arg2: memref<8x128xf32, #tpu.memory_space<vmem>>, %arg3: memref<8x128xf32, #tpu.memory_space<vmem>>) attributes {dimension_semantics = [#tpu.dimension_semantics<arbitrary>], iteration_bounds = array<i64: 2>, scalar_prefetch = 0 : i64, scratch_operands = 0 : i64, tpu.core_type = #tpu.core_type<tc>, window_params = [{transform_indices = @transform_0, window_bounds = array<i64: 8, 128>}, {pipeline_mode = #tpu.pipeline_mode<synchronous>, transform_indices = @transform_1, window_bounds = array<i64: 8, 128>}, {transform_indices = @transform_2, window_bounds = array<i64: 8, 128>}]} {
    %c0 = arith.constant 0 : index
    %c0_0 = arith.constant 0 : index
    %0 = vector.load %arg1[%c0, %c0_0] : memref<8x128xf32, #tpu.memory_space<vmem>>, vector<8x128xf32>
    %c0_1 = arith.constant 0 : index
    %c0_2 = arith.constant 0 : index
    %1 = vector.load %arg2[%c0_1, %c0_2] : memref<8x128xf32, #tpu.memory_space<vmem>>, vector<8x128xf32>
    %2 = arith.addf %0, %1 : vector<8x128xf32>
    %c0_3 = arith.constant 0 : index
    %c0_4 = arith.constant 0 : index
    %3 = vector.load %arg3[%c0_3, %c0_4] : memref<8x128xf32, #tpu.memory_space<vmem>>, vector<8x128xf32>
    tpu.vector_store %arg3[%c0_3, %c0_4], %2 {strides = array<i32>} : memref<8x128xf32, #tpu.memory_space<vmem>>, vector<8x128xf32>,
    return
  }
  func.func @transform_0(%arg0: i32) -> (i32, i32) {
    %c0_i32 = arith.constant 0 : i32
    %c0_i32_0 = arith.constant 0 : i32
    return %arg0, %c0_i32 : i32, i32
  }
  func.func @transform_1(%arg0: i32) -> (i32, i32) {
    %c0_i32 = arith.constant 0 : i32
    %c0_i32_0 = arith.constant 0 : i32
    %c0_i32_1 = arith.constant 0 : i32
    return %c0_i32, %c0_i32_0 : i32, i32
  }
  func.func @transform_2(%arg0: i32) -> (i32, i32) {
    %c0_i32 = arith.constant 0 : i32
    %c0_i32_0 = arith.constant 0 : i32
    return %arg0, %c0_i32 : i32, i32
  }
}

module attributes {stable_mosaic.version = 11 : i64} {
  func.func @self_attention_kernel(%arg0: i32, %arg1: memref<16x32xbf16, #tpu.memory_space<vmem>>, %arg2: memref<1x32xf32, #tpu.memory_space<vmem>>, %arg3: memref<1x32xf32, #tpu.memory_space<vmem>>, %arg4: memref<32x32xbf16, #tpu.memory_space<vmem>>, %arg5: memref<1x32xf32, #tpu.memory_space<vmem>>, %arg6: memref<32x32xbf16, #tpu.memory_space<vmem>>, %arg7: memref<1x32xf32, #tpu.memory_space<vmem>>, %arg8: memref<32x32xbf16, #tpu.memory_space<vmem>>, %arg9: memref<1x32xf32, #tpu.memory_space<vmem>>, %arg10: memref<32x32xbf16, #tpu.memory_space<vmem>>, %arg11: memref<1x32xf32, #tpu.memory_space<vmem>>, %arg12: memref<16x32xbf16, #tpu.memory_space<vmem>>) attributes {dimension_semantics = [#tpu.dimension_semantics<parallel>], iteration_bounds = array<i64: 1>, scalar_prefetch = 0 : i64, scratch_operands = 0 : i64, tpu.core_type = #tpu.core_type<tc>, window_params = [{transform_indices = @transform_0, window_bounds = array<i64: 16, 32>}, {pipeline_mode = #tpu.pipeline_mode<synchronous>, transform_indices = @transform_1, window_bounds = array<i64: 1, 32>}, {pipeline_mode = #tpu.pipeline_mode<synchronous>, transform_indices = @transform_2, window_bounds = array<i64: 1, 32>}, {pipeline_mode = #tpu.pipeline_mode<synchronous>, transform_indices = @transform_3, window_bounds = array<i64: 32, 32>}, {pipeline_mode = #tpu.pipeline_mode<synchronous>, transform_indices = @transform_4, window_bounds = array<i64: 1, 32>}, {pipeline_mode = #tpu.pipeline_mode<synchronous>, transform_indices = @transform_5, window_bounds = array<i64: 32, 32>}, {pipeline_mode = #tpu.pipeline_mode<synchronous>, transform_indices = @transform_6, window_bounds = array<i64: 1, 32>}, {pipeline_mode = #tpu.pipeline_mode<synchronous>, transform_indices = @transform_7, window_bounds = array<i64: 32, 32>}, {pipeline_mode = #tpu.pipeline_mode<synchronous>, transform_indices = @transform_8, window_bounds = array<i64: 1, 32>}, {pipeline_mode = #tpu.pipeline_mode<synchronous>, transform_indices = @transform_9, window_bounds = array<i64: 32, 32>}, {pipeline_mode = #tpu.pipeline_mode<synchronous>, transform_indices = @transform_10, window_bounds = array<i64: 1, 32>}, {transform_indices = @transform_11, window_bounds = array<i64: 16, 32>}]} {
    %c0 = arith.constant 0 : index
    %c0_0 = arith.constant 0 : index
    %0 = vector.load %arg1[%c0, %c0_0] : memref<16x32xbf16, #tpu.memory_space<vmem>>, vector<16x32xbf16>
    %1 = arith.extf %0 : vector<16x32xbf16> to vector<16x32xf32>
    %c0_1 = arith.constant 0 : index
    %c0_2 = arith.constant 0 : index
    %2 = vector.load %arg2[%c0_1, %c0_2] : memref<1x32xf32, #tpu.memory_space<vmem>>, vector<1x32xf32>
    %c0_3 = arith.constant 0 : index
    %c0_4 = arith.constant 0 : index
    %3 = vector.load %arg3[%c0_3, %c0_4] : memref<1x32xf32, #tpu.memory_space<vmem>>, vector<1x32xf32>
    %cst = arith.constant dense<0.000000e+00> : vector<16xf32>
    %4 = vector.multi_reduction <add>, %1, %cst [1] : vector<16x32xf32> to vector<16xf32>
    %5 = vector.shape_cast %4 : vector<16xf32> to vector<16x1xf32>
    %cst_5 = arith.constant 3.200000e+01 : f32
    %6 = vector.broadcast %cst_5 : f32 to vector<16x1xf32>
    %7 = arith.divf %5, %6 : vector<16x1xf32>
    %8 = vector.broadcast %7 : vector<16x1xf32> to vector<16x32xf32>
    %9 = arith.subf %1, %8 : vector<16x32xf32>
    %10 = arith.mulf %9, %9 : vector<16x32xf32>
    %cst_6 = arith.constant dense<0.000000e+00> : vector<16xf32>
    %11 = vector.multi_reduction <add>, %10, %cst_6 [1] : vector<16x32xf32> to vector<16xf32>
    %12 = vector.shape_cast %11 : vector<16xf32> to vector<16x1xf32>
    %cst_7 = arith.constant 3.200000e+01 : f32
    %13 = vector.broadcast %cst_7 : f32 to vector<16x1xf32>
    %14 = arith.divf %12, %13 : vector<16x1xf32>
    %15 = vector.broadcast %7 : vector<16x1xf32> to vector<16x32xf32>
    %16 = arith.subf %1, %15 : vector<16x32xf32>
    %cst_8 = arith.constant 9.99999974E-6 : f32
    %17 = vector.broadcast %cst_8 : f32 to vector<16x1xf32>
    %18 = arith.addf %14, %17 : vector<16x1xf32>
    %19 = math.rsqrt %18 : vector<16x1xf32>
    %20 = vector.broadcast %19 : vector<16x1xf32> to vector<16x32xf32>
    %21 = arith.mulf %16, %20 : vector<16x32xf32>
    %22 = vector.broadcast %2 : vector<1x32xf32> to vector<16x32xf32>
    %23 = arith.mulf %21, %22 : vector<16x32xf32>
    %24 = vector.broadcast %3 : vector<1x32xf32> to vector<16x32xf32>
    %25 = arith.addf %23, %24 : vector<16x32xf32>
    %c0_9 = arith.constant 0 : index
    %c0_10 = arith.constant 0 : index
    %26 = vector.load %arg4[%c0_9, %c0_10] : memref<32x32xbf16, #tpu.memory_space<vmem>>, vector<32x32xbf16>
    %c0_11 = arith.constant 0 : index
    %c0_12 = arith.constant 0 : index
    %27 = vector.load %arg5[%c0_11, %c0_12] : memref<1x32xf32, #tpu.memory_space<vmem>>, vector<1x32xf32>
    %c0_13 = arith.constant 0 : index
    %c0_14 = arith.constant 0 : index
    %28 = vector.load %arg6[%c0_13, %c0_14] : memref<32x32xbf16, #tpu.memory_space<vmem>>, vector<32x32xbf16>
    %c0_15 = arith.constant 0 : index
    %c0_16 = arith.constant 0 : index
    %29 = vector.load %arg7[%c0_15, %c0_16] : memref<1x32xf32, #tpu.memory_space<vmem>>, vector<1x32xf32>
    %c0_17 = arith.constant 0 : index
    %c0_18 = arith.constant 0 : index
    %30 = vector.load %arg8[%c0_17, %c0_18] : memref<32x32xbf16, #tpu.memory_space<vmem>>, vector<32x32xbf16>
    %c0_19 = arith.constant 0 : index
    %c0_20 = arith.constant 0 : index
    %31 = vector.load %arg9[%c0_19, %c0_20] : memref<1x32xf32, #tpu.memory_space<vmem>>, vector<1x32xf32>
    %c0_21 = arith.constant 0 : index
    %c0_22 = arith.constant 0 : index
    %32 = vector.load %arg10[%c0_21, %c0_22] : memref<32x32xbf16, #tpu.memory_space<vmem>>, vector<32x32xbf16>
    %c0_23 = arith.constant 0 : index
    %c0_24 = arith.constant 0 : index
    %33 = vector.load %arg11[%c0_23, %c0_24] : memref<1x32xf32, #tpu.memory_space<vmem>>, vector<1x32xf32>
    %34 = arith.truncf %25 : vector<16x32xf32> to vector<16x32xbf16>
    %cst_25 = arith.constant dense<0.000000e+00> : vector<16x32xf32>
    %35 = tpu.matmul %34, %26, %cst_25 {dimension_numbers = #tpu.dot_dimension_numbers<[1], [0], [0], [1], [0, 0, 1, 1], [], []>} : vector<16x32xbf16>, vector<32x32xbf16>, vector<16x32xf32> -> vector<16x32xf32>
    %36 = vector.broadcast %27 : vector<1x32xf32> to vector<16x32xf32>
    %37 = arith.addf %35, %36 : vector<16x32xf32>
    %cst_26 = arith.constant 0.353553385 : f32
    %38 = vector.broadcast %cst_26 : f32 to vector<16x32xf32>
    %39 = arith.mulf %37, %38 : vector<16x32xf32>
    %40 = arith.truncf %25 : vector<16x32xf32> to vector<16x32xbf16>
    %cst_27 = arith.constant dense<0.000000e+00> : vector<16x32xf32>
    %41 = tpu.matmul %40, %28, %cst_27 {dimension_numbers = #tpu.dot_dimension_numbers<[1], [0], [0], [1], [0, 0, 1, 1], [], []>} : vector<16x32xbf16>, vector<32x32xbf16>, vector<16x32xf32> -> vector<16x32xf32>
    %42 = vector.broadcast %29 : vector<1x32xf32> to vector<16x32xf32>
    %43 = arith.addf %41, %42 : vector<16x32xf32>
    %44 = arith.truncf %25 : vector<16x32xf32> to vector<16x32xbf16>
    %cst_28 = arith.constant dense<0.000000e+00> : vector<16x32xf32>
    %45 = tpu.matmul %44, %30, %cst_28 {dimension_numbers = #tpu.dot_dimension_numbers<[1], [0], [0], [1], [0, 0, 1, 1], [], []>} : vector<16x32xbf16>, vector<32x32xbf16>, vector<16x32xf32> -> vector<16x32xf32>
    %46 = vector.broadcast %31 : vector<1x32xf32> to vector<16x32xf32>
    %47 = arith.addf %45, %46 : vector<16x32xf32>
    %48 = vector.extract_strided_slice %39 {offsets = [0, 0], sizes = [16, 8], strides = [1, 1]} : vector<16x32xf32> to vector<16x8xf32>
    %49 = vector.shape_cast %48 : vector<16x8xf32> to vector<2x8x8xf32>
    %50 = vector.extract_strided_slice %39 {offsets = [0, 8], sizes = [16, 8], strides = [1, 1]} : vector<16x32xf32> to vector<16x8xf32>
    %51 = vector.shape_cast %50 : vector<16x8xf32> to vector<2x8x8xf32>
    %52 = vector.extract_strided_slice %39 {offsets = [0, 16], sizes = [16, 8], strides = [1, 1]} : vector<16x32xf32> to vector<16x8xf32>
    %53 = vector.shape_cast %52 : vector<16x8xf32> to vector<2x8x8xf32>
    %54 = vector.extract_strided_slice %39 {offsets = [0, 24], sizes = [16, 8], strides = [1, 1]} : vector<16x32xf32> to vector<16x8xf32>
    %55 = vector.shape_cast %54 : vector<16x8xf32> to vector<2x8x8xf32>
    %56 = tpu.concatenate %49, %51, %53, %55 in 0 : vector<2x8x8xf32>, vector<2x8x8xf32>, vector<2x8x8xf32>, vector<2x8x8xf32> -> vector<8x8x8xf32>
    %57 = vector.extract_strided_slice %43 {offsets = [0, 0], sizes = [16, 8], strides = [1, 1]} : vector<16x32xf32> to vector<16x8xf32>
    %58 = vector.shape_cast %57 : vector<16x8xf32> to vector<2x8x8xf32>
    %59 = vector.extract_strided_slice %43 {offsets = [0, 8], sizes = [16, 8], strides = [1, 1]} : vector<16x32xf32> to vector<16x8xf32>
    %60 = vector.shape_cast %59 : vector<16x8xf32> to vector<2x8x8xf32>
    %61 = vector.extract_strided_slice %43 {offsets = [0, 16], sizes = [16, 8], strides = [1, 1]} : vector<16x32xf32> to vector<16x8xf32>
    %62 = vector.shape_cast %61 : vector<16x8xf32> to vector<2x8x8xf32>
    %63 = vector.extract_strided_slice %43 {offsets = [0, 24], sizes = [16, 8], strides = [1, 1]} : vector<16x32xf32> to vector<16x8xf32>
    %64 = vector.shape_cast %63 : vector<16x8xf32> to vector<2x8x8xf32>
    %65 = tpu.concatenate %58, %60, %62, %64 in 0 : vector<2x8x8xf32>, vector<2x8x8xf32>, vector<2x8x8xf32>, vector<2x8x8xf32> -> vector<8x8x8xf32>
    %66 = vector.extract_strided_slice %47 {offsets = [0, 0], sizes = [16, 8], strides = [1, 1]} : vector<16x32xf32> to vector<16x8xf32>
    %67 = vector.shape_cast %66 : vector<16x8xf32> to vector<2x8x8xf32>
    %68 = vector.extract_strided_slice %47 {offsets = [0, 8], sizes = [16, 8], strides = [1, 1]} : vector<16x32xf32> to vector<16x8xf32>
    %69 = vector.shape_cast %68 : vector<16x8xf32> to vector<2x8x8xf32>
    %70 = vector.extract_strided_slice %47 {offsets = [0, 16], sizes = [16, 8], strides = [1, 1]} : vector<16x32xf32> to vector<16x8xf32>
    %71 = vector.shape_cast %70 : vector<16x8xf32> to vector<2x8x8xf32>
    %72 = vector.extract_strided_slice %47 {offsets = [0, 24], sizes = [16, 8], strides = [1, 1]} : vector<16x32xf32> to vector<16x8xf32>
    %73 = vector.shape_cast %72 : vector<16x8xf32> to vector<2x8x8xf32>
    %74 = tpu.concatenate %67, %69, %71, %73 in 0 : vector<2x8x8xf32>, vector<2x8x8xf32>, vector<2x8x8xf32>, vector<2x8x8xf32> -> vector<8x8x8xf32>
    %75 = arith.truncf %56 : vector<8x8x8xf32> to vector<8x8x8xbf16>
    %76 = arith.truncf %65 : vector<8x8x8xf32> to vector<8x8x8xbf16>
    "tpu.trace_start"() <{level = 10 : i32, message = "gqd,gkd->gqk"}> : () -> ()
    %cst_29 = arith.constant dense<0.000000e+00> : vector<8x8x8xf32>
    %77 = tpu.matmul %75, %76, %cst_29 {dimension_numbers = #tpu.dot_dimension_numbers<[2], [2], [1], [1], [0, 0, 0, 1, 1, 1], [0], [0]>} : vector<8x8x8xbf16>, vector<8x8x8xbf16>, vector<8x8x8xf32> -> vector<8x8x8xf32>
    "tpu.trace_stop"() : () -> ()
    %cst_30 = arith.constant dense<0xFF800000> : vector<8x8xf32>
    %78 = vector.multi_reduction <maximumf>, %77, %cst_30 [2] : vector<8x8x8xf32> to vector<8x8xf32>
    %79 = vector.shape_cast %78 : vector<8x8xf32> to vector<8x8x1xf32>
    %80 = vector.broadcast %79 : vector<8x8x1xf32> to vector<8x8x8xf32>
    %81 = arith.subf %77, %80 : vector<8x8x8xf32>
    %82 = math.exp %81 : vector<8x8x8xf32>
    %cst_31 = arith.constant dense<0.000000e+00> : vector<8x8xf32>
    %83 = vector.multi_reduction <add>, %82, %cst_31 [2] : vector<8x8x8xf32> to vector<8x8xf32>
    %84 = vector.shape_cast %83 : vector<8x8xf32> to vector<8x8x1xf32>
    %85 = vector.broadcast %84 : vector<8x8x1xf32> to vector<8x8x8xf32>
    %86 = arith.divf %82, %85 : vector<8x8x8xf32>
    %87 = arith.truncf %86 : vector<8x8x8xf32> to vector<8x8x8xbf16>
    %88 = arith.truncf %74 : vector<8x8x8xf32> to vector<8x8x8xbf16>
    "tpu.trace_start"() <{level = 10 : i32, message = "gqk,gkd->gqd"}> : () -> ()
    %cst_32 = arith.constant dense<0.000000e+00> : vector<8x8x8xf32>
    %89 = tpu.matmul %87, %88, %cst_32 {dimension_numbers = #tpu.dot_dimension_numbers<[2], [1], [1], [2], [0, 0, 0, 1, 1, 2], [0], [0]>} : vector<8x8x8xbf16>, vector<8x8x8xbf16>, vector<8x8x8xf32> -> vector<8x8x8xf32>
    "tpu.trace_stop"() : () -> ()
    %90 = vector.extract_strided_slice %89 {offsets = [0, 0, 0], sizes = [2, 8, 8], strides = [1, 1, 1]} : vector<8x8x8xf32> to vector<2x8x8xf32>
    %91 = vector.shape_cast %90 : vector<2x8x8xf32> to vector<16x8xf32>
    %92 = vector.extract_strided_slice %89 {offsets = [2, 0, 0], sizes = [2, 8, 8], strides = [1, 1, 1]} : vector<8x8x8xf32> to vector<2x8x8xf32>
    %93 = vector.shape_cast %92 : vector<2x8x8xf32> to vector<16x8xf32>
    %94 = vector.extract_strided_slice %89 {offsets = [4, 0, 0], sizes = [2, 8, 8], strides = [1, 1, 1]} : vector<8x8x8xf32> to vector<2x8x8xf32>
    %95 = vector.shape_cast %94 : vector<2x8x8xf32> to vector<16x8xf32>
    %96 = vector.extract_strided_slice %89 {offsets = [6, 0, 0], sizes = [2, 8, 8], strides = [1, 1, 1]} : vector<8x8x8xf32> to vector<2x8x8xf32>
    %97 = vector.shape_cast %96 : vector<2x8x8xf32> to vector<16x8xf32>
    %98 = tpu.concatenate %91, %93, %95, %97 in 1 : vector<16x8xf32>, vector<16x8xf32>, vector<16x8xf32>, vector<16x8xf32> -> vector<16x32xf32>
    %99 = arith.truncf %98 : vector<16x32xf32> to vector<16x32xbf16>
    %cst_33 = arith.constant dense<0.000000e+00> : vector<16x32xf32>
    %100 = tpu.matmul %99, %32, %cst_33 {dimension_numbers = #tpu.dot_dimension_numbers<[1], [0], [0], [1], [0, 0, 1, 1], [], []>} : vector<16x32xbf16>, vector<32x32xbf16>, vector<16x32xf32> -> vector<16x32xf32>
    %101 = vector.broadcast %33 : vector<1x32xf32> to vector<16x32xf32>
    %102 = arith.addf %100, %101 : vector<16x32xf32>
    %103 = arith.addf %1, %102 : vector<16x32xf32>
    %104 = arith.truncf %103 : vector<16x32xf32> to vector<16x32xbf16>
    %c0_34 = arith.constant 0 : index
    %c0_35 = arith.constant 0 : index
    %105 = vector.load %arg12[%c0_34, %c0_35] : memref<16x32xbf16, #tpu.memory_space<vmem>>, vector<16x32xbf16>
    tpu.vector_store %arg12[%c0_34, %c0_35], %104 {strides = array<i32>} : memref<16x32xbf16, #tpu.memory_space<vmem>>, vector<16x32xbf16>,
    return
  }
  func.func @transform_0(%arg0: i32) -> (i32, i32) {
    %c0_i32 = arith.constant 0 : i32
    %c0_i32_0 = arith.constant 0 : i32
    return %arg0, %c0_i32 : i32, i32
  }
  func.func @transform_1(%arg0: i32) -> (i32, i32) {
    %c0_i32 = arith.constant 0 : i32
    %c0_i32_0 = arith.constant 0 : i32
    %c0_i32_1 = arith.constant 0 : i32
    return %c0_i32, %c0_i32_0 : i32, i32
  }
  func.func @transform_2(%arg0: i32) -> (i32, i32) {
    %c0_i32 = arith.constant 0 : i32
    %c0_i32_0 = arith.constant 0 : i32
    %c0_i32_1 = arith.constant 0 : i32
    return %c0_i32, %c0_i32_0 : i32, i32
  }
  func.func @transform_3(%arg0: i32) -> (i32, i32) {
    %c0_i32 = arith.constant 0 : i32
    %c0_i32_0 = arith.constant 0 : i32
    %c0_i32_1 = arith.constant 0 : i32
    return %c0_i32, %c0_i32_0 : i32, i32
  }
  func.func @transform_4(%arg0: i32) -> (i32, i32) {
    %c0_i32 = arith.constant 0 : i32
    %c0_i32_0 = arith.constant 0 : i32
    %c0_i32_1 = arith.constant 0 : i32
    return %c0_i32, %c0_i32_0 : i32, i32
  }
  func.func @transform_5(%arg0: i32) -> (i32, i32) {
    %c0_i32 = arith.constant 0 : i32
    %c0_i32_0 = arith.constant 0 : i32
    %c0_i32_1 = arith.constant 0 : i32
    return %c0_i32, %c0_i32_0 : i32, i32
  }
  func.func @transform_6(%arg0: i32) -> (i32, i32) {
    %c0_i32 = arith.constant 0 : i32
    %c0_i32_0 = arith.constant 0 : i32
    %c0_i32_1 = arith.constant 0 : i32
    return %c0_i32, %c0_i32_0 : i32, i32
  }
  func.func @transform_7(%arg0: i32) -> (i32, i32) {
    %c0_i32 = arith.constant 0 : i32
    %c0_i32_0 = arith.constant 0 : i32
    %c0_i32_1 = arith.constant 0 : i32
    return %c0_i32, %c0_i32_0 : i32, i32
  }
  func.func @transform_8(%arg0: i32) -> (i32, i32) {
    %c0_i32 = arith.constant 0 : i32
    %c0_i32_0 = arith.constant 0 : i32
    %c0_i32_1 = arith.constant 0 : i32
    return %c0_i32, %c0_i32_0 : i32, i32
  }
  func.func @transform_9(%arg0: i32) -> (i32, i32) {
    %c0_i32 = arith.constant 0 : i32
    %c0_i32_0 = arith.constant 0 : i32
    %c0_i32_1 = arith.constant 0 : i32
    return %c0_i32, %c0_i32_0 : i32, i32
  }
  func.func @transform_10(%arg0: i32) -> (i32, i32) {
    %c0_i32 = arith.constant 0 : i32
    %c0_i32_0 = arith.constant 0 : i32
    %c0_i32_1 = arith.constant 0 : i32
    return %c0_i32, %c0_i32_0 : i32, i32
  }
  func.func @transform_11(%arg0: i32) -> (i32, i32) {
    %c0_i32 = arith.constant 0 : i32
    %c0_i32_0 = arith.constant 0 : i32
    return %arg0, %c0_i32 : i32, i32
  }
}

</mosaic_0001>

<llo_original>
// kernel: tpu_custom_call.1
$region0: #{tpu_custom_call.1}
  #allocation0 [shape = 'u32[]', space=smem, size = 0x4, offset = 0x4, fixed_abs, tag = 'smem constant byte address 0x4 - core index']
  #allocation1 [shape = 'u32[144,128]{1,0:T(1,128)}', space=vmem, size = 0x12000, scoped, tag = 'internal scratch']
  %s0 = inlined_call_operand.hbm [shape: f32[16,128], index: 0, kind: input, shape index: {}]
  %s1 = inlined_call_operand.hbm [shape: f32[8,128], index: 1, kind: input, shape index: {}]
  %s2 = inlined_call_operand.hbm [shape: f32[16,128], index: 2, kind: output, shape index: {}]
  %s3 = sld [smem:[#allocation0]]
  $region49: #{tpu_custom_call.1} parent=0
    _
  %s5 = ssub.s32 1, %s3
  %s6 = scalar_select 0, %s5, %s3
  $region1: #{tpu_custom_call.1} parent=0
    #allocation2 [shape = 'u8[8192]{0}', space=vmem, size = 0x2000, scoped, tag = 'input window, operand 0']
    #allocation3 [shape = 's32[2]{0}', space=sflag, size = 0x8, scoped, tag = 'scoped memory for tpu_custom_call.1']
    #allocation4 [shape = 's32[2]{0}', space=sflag, size = 0x8, scoped, tag = 'scoped memory for tpu_custom_call.1']
    #allocation5 [shape = 'u8[4096]{0}', space=vmem, size = 0x1000, scoped, tag = 'input window, operand 1, single buffered']
    #allocation6 [shape = 's32[1]{0}', space=sflag, size = 0x4, scoped, tag = 'scoped memory for tpu_custom_call.1']
    #allocation7 [shape = 'u8[8192]{0}', space=vmem, size = 0x2000, scoped, tag = 'output window, operand 0']
    %7 = vsyncpa [#allocation3], 0
    %s8 = scalar_lea.sflag [#allocation3], 1
    %9 = vsyncpa %s8, 0
    %10 = vsyncpa [#allocation6], 0
    %11 = vsyncpa [#allocation4], 0
    %s12 = scalar_lea.sflag [#allocation4], 1
    %13 = vsyncpa %s12, 0
    loop: start=0, step=1, limit=4
    $region2: #{tpu_custom_call.1} parent=1 // loop_pre_header
      _
    $region3: #{tpu_custom_call.1} parent=1 // loop_header
      %s15 = sphi 0, %s19
      %p16 = scmp.ge.s32.totalorder %s15, 4
      %s25 = sphi 0, %s27
      %s28 = sphi 0, %s25
      %s29 = sphi 0, %s28
      %s45 = sphi 0, %s29
      %s49 = sphi 0, %s49
      %s51 = sphi 0, %s49
      %s52 = sphi 0, %s51
      %s66 = sphi 0, %s52
      %s72 = sphi 0, %s74
      %s75 = sphi 0, %s72
      %s76 = sphi 0, %s75
      %s92 = sphi 0, %s76
    $region4: #{tpu_custom_call.1} parent=1 // loop_header_branch
      %18 = sbr.rel (%p16) target = $region8
    $region5: #{tpu_custom_call.1} parent=1 // loop_body
      %s20 = ssub.s32 %s15, 1
      %s21 = ssub.s32 %s15, 2
      %s22 = sadd.s32 %s15, 1
      %s23 = ssub.s32 %s15, %s22
      %p24 = scmp.eq.s32.totalorder %s23, 0
      %s26 = sadd.s32 %s25, 1
      %s27 = scalar_select %p24, %s25, %s26
      %p30 = pneg %p24
      %p31 = scmp.eq.s32.totalorder %s15, 1
      %p32 = por %p30, %p31
      %p33 = scmp.ne.s32.totalorder %s25, %s28
      %p34 = scmp.eq.s32.totalorder %s15, 0
      %p35 = por %p33, %p34
      %p36 = scmp.ne.s32.totalorder %s25, %s28
      %p37 = scmp.eq.s32.totalorder %s20, 1
      %p38 = por %p36, %p37
      %p39 = scmp.ne.s32.totalorder %s28, %s29
      %p40 = scmp.eq.s32.totalorder %s20, 0
      %p41 = por %p39, %p40
      %p42 = scmp.ne.s32.totalorder %s28, %s29
      %p43 = scmp.eq.s32.totalorder %s21, 1
      %p44 = por %p42, %p43
      %p46 = scmp.ne.s32.totalorder %s29, %s45
      %p47 = scmp.eq.s32.totalorder %s21, 0
      %p48 = por %p46, %p47
      %s50 = sadd.s32 %s49, 1
      %p53 = scmp.eq.s32.totalorder %s15, 1
      %p54 = scmp.ne.s32.totalorder %s49, %s51
      %p55 = scmp.eq.s32.totalorder %s15, 0
      %p56 = por %p54, %p55
      %p57 = scmp.ne.s32.totalorder %s49, %s51
      %p58 = scmp.eq.s32.totalorder %s20, 1
      %p59 = por %p57, %p58
      %p60 = scmp.ne.s32.totalorder %s51, %s52
      %p61 = scmp.eq.s32.totalorder %s20, 0
      %p62 = por %p60, %p61
      %p63 = scmp.ne.s32.totalorder %s51, %s52
      %p64 = scmp.eq.s32.totalorder %s21, 1
      %p65 = por %p63, %p64
      %p67 = scmp.ne.s32.totalorder %s52, %s66
      %p68 = scmp.eq.s32.totalorder %s21, 0
      %p69 = por %p67, %p68
      %s70 = ssub.s32 %s15, %s22
      %p71 = scmp.eq.s32.totalorder %s70, 0
      %s73 = sadd.s32 %s72, 1
      %s74 = scalar_select %p71, %s72, %s73
      %p77 = pneg %p71
      %p78 = scmp.eq.s32.totalorder %s15, 1
      %p79 = por %p77, %p78
      %p80 = scmp.ne.s32.totalorder %s72, %s75
      %p81 = scmp.eq.s32.totalorder %s15, 0
      %p82 = por %p80, %p81
      %p83 = scmp.ne.s32.totalorder %s72, %s75
      %p84 = scmp.eq.s32.totalorder %s20, 1
      %p85 = por %p83, %p84
      %p86 = scmp.ne.s32.totalorder %s75, %s76
      %p87 = scmp.eq.s32.totalorder %s20, 0
      %p88 = por %p86, %p87
      %p89 = scmp.ne.s32.totalorder %s75, %s76
      %p90 = scmp.eq.s32.totalorder %s21, 1
      %p91 = por %p89, %p90
      %p93 = scmp.ne.s32.totalorder %s76, %s92
      %p94 = scmp.eq.s32.totalorder %s21, 0
      %p95 = por %p93, %p94
      %p96 = scmp.le.s32.totalorder 1, %s15
      %p97 = scmp.lt.s32.totalorder %s15, 3
      %p98 = pnand %p96, %p97
      %p99 = pneg %p98
      // Predicated region
      $region9: #{tpu_custom_call.1} parent=5 // pred_check
        _
      $region10: #{tpu_custom_call.1} parent=5 // pred_check_branch
        %101 = sbr.rel (%p98) target = $region12
      $region11: #{tpu_custom_call.1} parent=5 // pred_region
        %s102 = ssub.s32 %s15, 1
        // Predicated region
        $region13: #{tpu_custom_call.1} parent=11 // pred_check
          %p103 = pneg %p62
        $region14: #{tpu_custom_call.1} parent=11 // pred_check_branch
          %105 = sbr.rel (%p103) target = $region16
        $region15: #{tpu_custom_call.1} parent=11 // pred_region
          %s107 = ssub.s32 128, 128
          %108 = vsyncadd [#allocation6], %s107
          %s110 = sshll.u32 [#allocation5], 4
          %s111 = int_to_ptr.vmem [resolvable:$true] %s110
          %113 = dma.hbm_to_vmem [thread:$0]  %s1, 128, %s111, [#allocation6]
        $region16: #{tpu_custom_call.1} parent=11 // pred_fallthru
          _
      $region12: #{tpu_custom_call.1} parent=5 // pred_fallthru
        _
      %p114 = scmp.lt.s32.totalorder %s15, 2
      // Predicated region
      $region17: #{tpu_custom_call.1} parent=5 // pred_check
        %p115 = pneg %p114
      $region18: #{tpu_custom_call.1} parent=5 // pred_check_branch
        %117 = sbr.rel (%p115) target = $region20
      $region19: #{tpu_custom_call.1} parent=5 // pred_region
        // Predicated region
        $region21: #{tpu_custom_call.1} parent=19 // pred_check
          %p118 = pneg %p35
        $region22: #{tpu_custom_call.1} parent=19 // pred_check_branch
          %120 = sbr.rel (%p118) target = $region24
        $region23: #{tpu_custom_call.1} parent=19 // pred_region
          %s121 = sand.u32 %s25, 1
          %s122 = scalar_lea.sflag [#allocation3], %s121
          %s123 = sand.u32 %s25, 1
          %s124 = smul.addr %s123, 8
          %s125 = scalar_lea.vmem [#allocation2], %s124
          %s127 = ssub.s32 128, 128
          %128 = vsyncadd %s122, %s127
          %s129 = smul.addr %s15, 128
          %s130 = scalar_lea.hbm %s0, %s129
          %s132 = sshll.u32 %s125, 4
          %s133 = int_to_ptr.vmem [resolvable:$true] %s132
          %135 = dma.hbm_to_vmem [thread:$0]  %s130, 128, %s133, %s122
        $region24: #{tpu_custom_call.1} parent=19 // pred_fallthru
          _
      $region20: #{tpu_custom_call.1} parent=5 // pred_fallthru
        _
      %p136 = scmp.le.s32.totalorder 1, %s15
      %p137 = scmp.lt.s32.totalorder %s15, 3
      %p138 = pnand %p136, %p137
      %p139 = pneg %p138
      // Predicated region
      $region25: #{tpu_custom_call.1} parent=5 // pred_check
        _
      $region26: #{tpu_custom_call.1} parent=5 // pred_check_branch
        %141 = sbr.rel (%p138) target = $region28
      $region27: #{tpu_custom_call.1} parent=5 // pred_region
        %s142 = ssub.s32 %s15, 1
        %s143 = sand.u32 %s28, 1
        %s144 = scalar_lea.sflag [#allocation3], %s143
        %s145 = sand.u32 %s28, 1
        %s146 = smul.addr %s145, 8
        %s147 = scalar_lea.vmem [#allocation2], %s146
        // Predicated region
        $region29: #{tpu_custom_call.1} parent=27 // pred_check
          %p148 = pneg %p41
        $region30: #{tpu_custom_call.1} parent=27 // pred_check_branch
          %150 = sbr.rel (%p148) target = $region32
        $region31: #{tpu_custom_call.1} parent=27 // pred_region
          %151 = dma.done %s144, 128
        $region32: #{tpu_custom_call.1} parent=27 // pred_fallthru
          _
        // Predicated region
        $region33: #{tpu_custom_call.1} parent=27 // pred_check
          %p152 = pneg %p62
        $region34: #{tpu_custom_call.1} parent=27 // pred_check_branch
          %154 = sbr.rel (%p152) target = $region36
        $region35: #{tpu_custom_call.1} parent=27 // pred_region
          %155 = dma.done [#allocation6], 128
        $region36: #{tpu_custom_call.1} parent=27 // pred_fallthru
          _
        %s156 = sand.u32 %s28, 1
        %s157 = scalar_lea.sflag [#allocation3], %s156
        %s158 = sand.u32 %s28, 1
        %s159 = smul.addr %s158, 8
        %s160 = scalar_lea.vmem [#allocation2], %s159
        %p161 = pneg %p41
        %p162 = pneg %p38
        %p163 = pneg %p62
        %p164 = pneg %p59
        %p165 = pneg %p88
        %p166 = pneg %p85
        %s167 = sand.u32 %s75, 1
        %s168 = scalar_lea.sflag [#allocation4], %s167
        %s169 = sand.u32 %s75, 1
        %s170 = smul.addr %s169, 8
        %s171 = scalar_lea.vmem [#allocation7], %s170
        %v172 = vld [vmem:[%s147] sm:$0xff]
        %v173 = vld [vmem:[#allocation5] sm:$0xff]
        %v174 = vadd.f32 %v172, %v173
        %175 = vst [vmem:[%s171] sm:$0xff] %v174
        %s176 = sand.u32 %s75, 1
        %s177 = scalar_lea.sflag [#allocation4], %s176
        %s178 = sand.u32 %s75, 1
        %s179 = smul.addr %s178, 8
        %s180 = scalar_lea.vmem [#allocation7], %s179
        // Predicated region
        $region37: #{tpu_custom_call.1} parent=27 // pred_check
          %p181 = pneg %p85
        $region38: #{tpu_custom_call.1} parent=27 // pred_check_branch
          %183 = sbr.rel (%p181) target = $region40
        $region39: #{tpu_custom_call.1} parent=27 // pred_region
          %s185 = ssub.s32 128, 128
          %186 = vsyncadd %s177, %s185
          %s187 = smul.addr %s20, 128
          %s188 = scalar_lea.hbm %s2, %s187
          %s190 = sshll.u32 %s180, 4
          %s191 = int_to_ptr.vmem [resolvable:$true] %s190
          %193 = dma.vmem_to_hbm [thread:$0]  %s191, 128, %s188, %s177
        $region40: #{tpu_custom_call.1} parent=27 // pred_fallthru
          _
      $region28: #{tpu_custom_call.1} parent=5 // pred_fallthru
        _
      %p194 = scmp.le.s32.totalorder 2, %s15
      // Predicated region
      $region41: #{tpu_custom_call.1} parent=5 // pred_check
        %p195 = pneg %p194
      $region42: #{tpu_custom_call.1} parent=5 // pred_check_branch
        %197 = sbr.rel (%p195) target = $region44
      $region43: #{tpu_custom_call.1} parent=5 // pred_region
        %s198 = ssub.s32 %s15, 2
        // Predicated region
        $region45: #{tpu_custom_call.1} parent=43 // pred_check
          %p199 = pneg %p91
        $region46: #{tpu_custom_call.1} parent=43 // pred_check_branch
          %201 = sbr.rel (%p199) target = $region48
        $region47: #{tpu_custom_call.1} parent=43 // pred_region
          %s202 = sand.u32 %s76, 1
          %s203 = scalar_lea.sflag [#allocation4], %s202
          %s204 = sand.u32 %s76, 1
          %s205 = smul.addr %s204, 8
          %s206 = scalar_lea.vmem [#allocation7], %s205
          %207 = dma.done %s203, 128
        $region48: #{tpu_custom_call.1} parent=43 // pred_fallthru
          _
      $region44: #{tpu_custom_call.1} parent=5 // pred_fallthru
        _
    $region6: #{tpu_custom_call.1} parent=1 // loop_footer
      %s19 = sadd.s32 1, %s15
    $region7: #{tpu_custom_call.1} parent=1 // loop_footer_branch
      %14 = sbr.rel target = $region3
    $region8: #{tpu_custom_call.1} parent=1 // loop_exit
      _
    %208 = vsyncpa [#allocation3], 1
    %s209 = scalar_lea.sflag [#allocation3], 1
    %210 = vsyncpa %s209, 1
    %211 = vsyncpa [#allocation6], 1
    %212 = vsyncpa [#allocation4], 1
    %s213 = scalar_lea.sflag [#allocation4], 1
    %214 = vsyncpa %s213, 1

// kernel: tpu_custom_call.1
$region0: #{tpu_custom_call.1}
  #allocation0 [shape = 'u32[]', space=smem, size = 0x4, offset = 0x4, fixed_abs, tag = 'smem constant byte address 0x4 - core index']
  #allocation1 [shape = 'u32[144,128]{1,0:T(1,128)}', space=vmem, size = 0x12000, scoped, tag = 'internal scratch']
  %s0 = inlined_call_operand.hbm [shape: bf16[16,32], index: 0, kind: input, shape index: {}]
  %s1 = inlined_call_operand.vmem [shape: f32[1,32], index: 1, kind: input, shape index: {}]
  %s2 = inlined_call_operand.vmem [shape: f32[1,32], index: 2, kind: input, shape index: {}]
  %s3 = inlined_call_operand.hbm [shape: bf16[32,32], index: 3, kind: input, shape index: {}]
  %s4 = inlined_call_operand.hbm [shape: f32[1,32], index: 4, kind: input, shape index: {}]
  %s5 = inlined_call_operand.vmem [shape: bf16[32,32], index: 5, kind: input, shape index: {}]
  %s6 = inlined_call_operand.hbm [shape: f32[1,32], index: 6, kind: input, shape index: {}]
  %s7 = inlined_call_operand.hbm [shape: bf16[32,32], index: 7, kind: input, shape index: {}]
  %s8 = inlined_call_operand.hbm [shape: f32[1,32], index: 8, kind: input, shape index: {}]
  %s9 = inlined_call_operand.vmem [shape: bf16[32,32], index: 9, kind: input, shape index: {}]
  %s10 = inlined_call_operand.vmem [shape: f32[1,32], index: 10, kind: input, shape index: {}]
  %s11 = inlined_call_operand.hbm [shape: bf16[16,32], index: 11, kind: output, shape index: {}]
  %s12 = sld [smem:[#allocation0]]
  $region78: #{tpu_custom_call.1} parent=0
    _
  %s14 = ssub.s32 1, %s12
  %s15 = scalar_select 0, %s14, %s12
  $region1: #{tpu_custom_call.1} parent=0
    #allocation2 [shape = 'u8[4096]{0}', space=vmem, size = 0x1000, scoped, tag = 'input window, operand 0, single buffered']
    #allocation3 [shape = 's32[1]{0}', space=sflag, size = 0x4, scoped, tag = 'scoped memory for tpu_custom_call.1']
    #allocation4 [shape = 's32[1]{0}', space=sflag, size = 0x4, scoped, tag = 'scoped memory for tpu_custom_call.1']
    #allocation5 [shape = 'u8[8192]{0}', space=vmem, size = 0x2000, scoped, tag = 'input window, operand 3, single buffered']
    #allocation6 [shape = 's32[1]{0}', space=sflag, size = 0x4, scoped, tag = 'scoped memory for tpu_custom_call.1']
    #allocation7 [shape = 'u8[512]{0}', space=vmem, size = 0x400, scoped, tag = 'input window, operand 4, single buffered']
    #allocation8 [shape = 'u8[512]{0}', space=vmem, size = 0x400, scoped, tag = 'input window, operand 6, single buffered']
    #allocation9 [shape = 's32[1]{0}', space=sflag, size = 0x4, scoped, tag = 'scoped memory for tpu_custom_call.1']
    #allocation10 [shape = 'u8[8192]{0}', space=vmem, size = 0x2000, scoped, tag = 'input window, operand 7, single buffered']
    #allocation11 [shape = 'u8[512]{0}', space=vmem, size = 0x400, scoped, tag = 'input window, operand 8, single buffered']
    #allocation12 [shape = 's32[1]{0}', space=sflag, size = 0x4, scoped, tag = 'scoped memory for tpu_custom_call.1']
    #allocation13 [shape = 'u8[4096]{0}', space=vmem, size = 0x1000, scoped, tag = 'output window, operand 0, single buffered']
    %16 = vsyncpa [#allocation3], 0
    %17 = vsyncpa [#allocation6], 0
    %18 = vsyncpa [#allocation9], 0
    %19 = vsyncpa [#allocation12], 0
    %20 = vsyncpa [#allocation4], 0
    // Predicated region
    $region2: #{tpu_custom_call.1} parent=1 // pred_check
      _
    $region3: #{tpu_custom_call.1} parent=1 // pred_check_branch
      %22 = sbr.rel (0) target = $region5
    $region4: #{tpu_custom_call.1} parent=1 // pred_region
      %s24 = ssub.s32 128, 128
      %25 = vsyncadd [#allocation3], %s24
      %s26 = sshll.u32 [#allocation2], 4
      %s27 = int_to_ptr.vmem [resolvable:$true] %s26
      %32 = dma.hbm_to_vmem [thread:$0]  %s0, 128, %s27, [#allocation3], 64, 64, 4
    $region5: #{tpu_custom_call.1} parent=1 // pred_fallthru
      _
    // Predicated region
    $region6: #{tpu_custom_call.1} parent=1 // pred_check
      _
    $region7: #{tpu_custom_call.1} parent=1 // pred_check_branch
      %34 = sbr.rel (0) target = $region9
    $region8: #{tpu_custom_call.1} parent=1 // pred_region
      _
    $region9: #{tpu_custom_call.1} parent=1 // pred_fallthru
      _
    // Predicated region
    $region10: #{tpu_custom_call.1} parent=1 // pred_check
      _
    $region11: #{tpu_custom_call.1} parent=1 // pred_check_branch
      %36 = sbr.rel (0) target = $region13
    $region12: #{tpu_custom_call.1} parent=1 // pred_region
      _
    $region13: #{tpu_custom_call.1} parent=1 // pred_fallthru
      _
    // Predicated region
    $region14: #{tpu_custom_call.1} parent=1 // pred_check
      _
    $region15: #{tpu_custom_call.1} parent=1 // pred_check_branch
      %38 = sbr.rel (0) target = $region17
    $region16: #{tpu_custom_call.1} parent=1 // pred_region
      %s40 = ssub.s32 256, 256
      %41 = vsyncadd [#allocation6], %s40
      %s42 = sshll.u32 [#allocation5], 4
      %s43 = int_to_ptr.vmem [resolvable:$true] %s42
      %48 = dma.hbm_to_vmem [thread:$0]  %s3, 256, %s43, [#allocation6], 64, 64, 4
    $region17: #{tpu_custom_call.1} parent=1 // pred_fallthru
      _
    // Predicated region
    $region18: #{tpu_custom_call.1} parent=1 // pred_check
      _
    $region19: #{tpu_custom_call.1} parent=1 // pred_check_branch
      %50 = sbr.rel (0) target = $region21
    $region20: #{tpu_custom_call.1} parent=1 // pred_region
      %s52 = ssub.s32 16, 16
      %53 = vsyncadd [#allocation6], %s52
      %s55 = sshll.u32 [#allocation7], 4
      %s56 = int_to_ptr.vmem [resolvable:$true] %s55
      %58 = dma.hbm_to_vmem [thread:$0]  %s4, 16, %s56, [#allocation6]
    $region21: #{tpu_custom_call.1} parent=1 // pred_fallthru
      _
    // Predicated region
    $region22: #{tpu_custom_call.1} parent=1 // pred_check
      _
    $region23: #{tpu_custom_call.1} parent=1 // pred_check_branch
      %60 = sbr.rel (0) target = $region25
    $region24: #{tpu_custom_call.1} parent=1 // pred_region
      _
    $region25: #{tpu_custom_call.1} parent=1 // pred_fallthru
      _
    // Predicated region
    $region26: #{tpu_custom_call.1} parent=1 // pred_check
      _
    $region27: #{tpu_custom_call.1} parent=1 // pred_check_branch
      %62 = sbr.rel (0) target = $region29
    $region28: #{tpu_custom_call.1} parent=1 // pred_region
      %s64 = ssub.s32 16, 16
      %65 = vsyncadd [#allocation9], %s64
      %s67 = sshll.u32 [#allocation8], 4
      %s68 = int_to_ptr.vmem [resolvable:$true] %s67
      %70 = dma.hbm_to_vmem [thread:$0]  %s6, 16, %s68, [#allocation9]
    $region29: #{tpu_custom_call.1} parent=1 // pred_fallthru
      _
    // Predicated region
    $region30: #{tpu_custom_call.1} parent=1 // pred_check
      _
    $region31: #{tpu_custom_call.1} parent=1 // pred_check_branch
      %72 = sbr.rel (0) target = $region33
    $region32: #{tpu_custom_call.1} parent=1 // pred_region
      %s74 = ssub.s32 256, 256
      %75 = vsyncadd [#allocation9], %s74
      %s76 = sshll.u32 [#allocation10], 4
      %s77 = int_to_ptr.vmem [resolvable:$true] %s76
      %82 = dma.hbm_to_vmem [thread:$0]  %s7, 256, %s77, [#allocation9], 64, 64, 4
    $region33: #{tpu_custom_call.1} parent=1 // pred_fallthru
      _
    // Predicated region
    $region34: #{tpu_custom_call.1} parent=1 // pred_check
      _
    $region35: #{tpu_custom_call.1} parent=1 // pred_check_branch
      %84 = sbr.rel (0) target = $region37
    $region36: #{tpu_custom_call.1} parent=1 // pred_region
      %s86 = ssub.s32 16, 16
      %87 = vsyncadd [#allocation12], %s86
      %s89 = sshll.u32 [#allocation11], 4
      %s90 = int_to_ptr.vmem [resolvable:$true] %s89
      %92 = dma.hbm_to_vmem [thread:$0]  %s8, 16, %s90, [#allocation12]
    $region37: #{tpu_custom_call.1} parent=1 // pred_fallthru
      _
    // Predicated region
    $region38: #{tpu_custom_call.1} parent=1 // pred_check
      _
    $region39: #{tpu_custom_call.1} parent=1 // pred_check_branch
      %94 = sbr.rel (0) target = $region41
    $region40: #{tpu_custom_call.1} parent=1 // pred_region
      _
    $region41: #{tpu_custom_call.1} parent=1 // pred_fallthru
      _
    // Predicated region
    $region42: #{tpu_custom_call.1} parent=1 // pred_check
      _
    $region43: #{tpu_custom_call.1} parent=1 // pred_check_branch
      %96 = sbr.rel (0) target = $region45
    $region44: #{tpu_custom_call.1} parent=1 // pred_region
      _
    $region45: #{tpu_custom_call.1} parent=1 // pred_fallthru
      _
    // Predicated region
    $region46: #{tpu_custom_call.1} parent=1 // pred_check
      _
    $region47: #{tpu_custom_call.1} parent=1 // pred_check_branch
      %98 = sbr.rel (0) target = $region49
    $region48: #{tpu_custom_call.1} parent=1 // pred_region
      %99 = dma.done [#allocation3], 128
    $region49: #{tpu_custom_call.1} parent=1 // pred_fallthru
      _
    // Predicated region
    $region50: #{tpu_custom_call.1} parent=1 // pred_check
      _
    $region51: #{tpu_custom_call.1} parent=1 // pred_check_branch
      %101 = sbr.rel (0) target = $region53
    $region52: #{tpu_custom_call.1} parent=1 // pred_region
      %102 = dma.done [#allocation6], 256
    $region53: #{tpu_custom_call.1} parent=1 // pred_fallthru
      _
    // Predicated region
    $region54: #{tpu_custom_call.1} parent=1 // pred_check
      _
    $region55: #{tpu_custom_call.1} parent=1 // pred_check_branch
      %104 = sbr.rel (0) target = $region57
    $region56: #{tpu_custom_call.1} parent=1 // pred_region
      %105 = dma.done [#allocation6], 16
    $region57: #{tpu_custom_call.1} parent=1 // pred_fallthru
      _
    // Predicated region
    $region58: #{tpu_custom_call.1} parent=1 // pred_check
      _
    $region59: #{tpu_custom_call.1} parent=1 // pred_check_branch
      %107 = sbr.rel (0) target = $region61
    $region60: #{tpu_custom_call.1} parent=1 // pred_region
      %108 = dma.done [#allocation9], 16
    $region61: #{tpu_custom_call.1} parent=1 // pred_fallthru
      _
    // Predicated region
    $region62: #{tpu_custom_call.1} parent=1 // pred_check
      _
    $region63: #{tpu_custom_call.1} parent=1 // pred_check_branch
      %110 = sbr.rel (0) target = $region65
    $region64: #{tpu_custom_call.1} parent=1 // pred_region
      %111 = dma.done [#allocation9], 256
    $region65: #{tpu_custom_call.1} parent=1 // pred_fallthru
      _
    // Predicated region
    $region66: #{tpu_custom_call.1} parent=1 // pred_check
      _
    $region67: #{tpu_custom_call.1} parent=1 // pred_check_branch
      %113 = sbr.rel (0) target = $region69
    $region68: #{tpu_custom_call.1} parent=1 // pred_region
      %114 = dma.done [#allocation12], 16
    $region69: #{tpu_custom_call.1} parent=1 // pred_fallthru
      _
    %v116 = vld [vmem:[#allocation2] sm:$0xf]
    %v117 = vld [vmem:[#allocation2 + $0x4] sm:$0xf]
    %v118 = vunpack.c.l.bf16 %v116
    %v119 = vunpack.c.l.bf16 %v117
    %v120 = vld [vmem:[%s1] sm:$0x1]
    %v121 = vld [vmem:[%s2] sm:$0x1]
    %vm122 = vcmask 261120
    %v123 = vsel %vm122, %v118, 0.0
    %124 = vadd.xlane.f32.xlu0 %v123
    %v125 = vpop.xlane.xlu0 %124
    %v126 = vsel %vm122, %v119, 0.0
    %127 = vadd.xlane.f32.xlu0 %v126
    %v128 = vpop.xlane.xlu0 %127
    %v129 = vrcp.pop 32.0
    %v130 = vmul.f32 %v125, %v129
    %v131 = vmul.f32 %v128, %v129
    %v132 = vsub.f32 %v118, %v130
    %v133 = vsub.f32 %v119, %v131
    %v134 = vmul.f32 %v132, %v132
    %v135 = vmul.f32 %v133, %v133
    %v136 = vsel %vm122, %v134, 0.0
    %137 = vadd.xlane.f32.xlu0 %v136
    %v138 = vpop.xlane.xlu0 %137
    %v139 = vsel %vm122, %v135, 0.0
    %140 = vadd.xlane.f32.xlu0 %v139
    %v141 = vpop.xlane.xlu0 %140
    %v142 = vmul.f32 %v138, %v129
    %v143 = vmul.f32 %v141, %v129
    %v144 = vadd.f32 %v142, 1e-05
    %v145 = vadd.f32 %v143, 1e-05
    %v146 = vrsqrt.pop %v144
    %v147 = vrsqrt.pop %v145
    %v148 = vmul.f32 %v132, %v146
    %v149 = vmul.f32 %v133, %v147
    %v151 = vlaneseq
    %v152 = vshrl.u32 %v151, 7
    %v153 = vsub.s32 0, %v152
    %v154 = vrot.slane %v120, %v153
    %v156 = vmul.f32 %v148, %v154
    %v157 = vmul.f32 %v149, %v154
    %v159 = vlaneseq
    %v160 = vshrl.u32 %v159, 7
    %v161 = vsub.s32 0, %v160
    %v162 = vrot.slane %v121, %v161
    %v164 = vadd.f32 %v156, %v162
    %v165 = vadd.f32 %v157, %v162
    %v166 = vld [vmem:[#allocation5] sm:$0xf]
    %v167 = vld [vmem:[#allocation5 + $0x4] sm:$0xf]
    %v168 = vld [vmem:[#allocation5 + $0x8] sm:$0xf]
    %v169 = vld [vmem:[#allocation5 + $0xc] sm:$0xf]
    %v170 = vld [vmem:[#allocation7] sm:$0x1]
    %v171 = vld [vmem:[%s5] sm:$0xf]
    %v172 = vld [vmem:[%s5 + $0x4] sm:$0xf]
    %v173 = vld [vmem:[%s5 + $0x8] sm:$0xf]
    %v174 = vld [vmem:[%s5 + $0xc] sm:$0xf]
    %v175 = vld [vmem:[#allocation8] sm:$0x1]
    %v176 = vld [vmem:[#allocation10] sm:$0xf]
    %v177 = vld [vmem:[#allocation10 + $0x4] sm:$0xf]
    %v178 = vld [vmem:[#allocation10 + $0x8] sm:$0xf]
    %v179 = vld [vmem:[#allocation10 + $0xc] sm:$0xf]
    %v180 = vld [vmem:[#allocation11] sm:$0x1]
    %v181 = vld [vmem:[%s9] sm:$0xf]
    %v182 = vld [vmem:[%s9 + $0x4] sm:$0xf]
    %v183 = vld [vmem:[%s9 + $0x8] sm:$0xf]
    %v184 = vld [vmem:[%s9 + $0xc] sm:$0xf]
    %v185 = vld [vmem:[%s10] sm:$0x1]
    %v186 = vpack.c.bf16 %v165, %v164
    %v188 = vlaneseq
    %v189 = vshrl.u32 %v188, 7
    %v190 = vsub.s32 0, %v189
    %v191 = vrot.slane %v170, %v190
    %v197 = vunpack.c.l.b16 %v166
    %v198 = vunpack.c.l.b16 %v167
    %v199 = vunpack.c.l.b16 %v168
    %v200 = vunpack.c.l.b16 %v169
    %v201 = vpack.c.b16 %v198, %v197
    %v202 = vpack.c.b16 %v200, %v199
    %v206 = vsel %vm122, %v186, 0
    %208 = vmatprep.subr.bf16.mxu0 0
    %209 = vmatpush1.bf16.msra.mxu0 %v201
    %210 = vmatprep.subr.bf16.mxu0 0
    %211 = vmatpush1.bf16.msra.mxu0 %v202
    %212 = vmatprep.subr.bf16.mxu0 0
    %213 = vmatpush1.bf16.msra.mxu0 0
    %214 = vmatprep.subr.bf16.mxu0 0
    %215 = vmatpush1.bf16.msra.mxu0 0
    %216 = vmatprep.subr.bf16.mxu0 0
    %217 = vmatpush1.bf16.msra.mxu0 0
    %218 = vmatprep.subr.bf16.mxu0 0
    %219 = vmatpush1.bf16.msra.mxu0 0
    %220 = vmatprep.subr.bf16.mxu0 0
    %221 = vmatpush1.bf16.msra.mxu0 0
    %222 = vmatprep.subr.bf16.mxu0 0
    %223 = vmatpush1.bf16.msra.mxu0 0
    %224 = vmatprep.subr.bf16.mxu0 0
    %225 = vmatpush1.bf16.msra.mxu0 0
    %226 = vmatprep.subr.bf16.mxu0 0
    %227 = vmatpush1.bf16.msra.mxu0 0
    %228 = vmatprep.subr.bf16.mxu0 0
    %229 = vmatpush1.bf16.msra.mxu0 0
    %230 = vmatprep.subr.bf16.mxu0 0
    %231 = vmatpush1.bf16.msra.mxu0 0
    %232 = vmatprep.subr.bf16.mxu0 0
    %233 = vmatpush1.bf16.msra.mxu0 0
    %234 = vmatprep.subr.bf16.mxu0 0
    %235 = vmatpush1.bf16.msra.mxu0 0
    %236 = vmatprep.subr.bf16.mxu0 0
    %237 = vmatpush1.bf16.msra.mxu0 0
    %238 = vmatprep.subr.bf16.mxu0 0
    %239 = vmatpush1.bf16.msra.mxu0 0
    %240 = vmatprep.mubr.bf16.mxu0 0
    %241 = vmatmul.mubr.bf16.gmra.mrb[0].mxu0 %v206
    %v242 = vpop.f32.mrb[0].mxu0
    %v243 = vadd.f32 %v191, %v242
    %v244 = vpop.f32.mrb[0].mxu0
    %v245 = vpop.f32.mrb[0].mxu0
    %v246 = vadd.f32 %v191, %v245
    %v247 = vpop.f32.mrb[0].mxu0
    %248 = vdwg.mxu0
    %v249 = vmul.f32 %v243, 0.35355338
    %v250 = vmul.f32 %v246, 0.35355338
    %v252 = vlaneseq
    %v253 = vshrl.u32 %v252, 7
    %v254 = vsub.s32 0, %v253
    %v255 = vrot.slane %v175, %v254
    %v261 = vunpack.c.l.b16 %v171
    %v262 = vunpack.c.l.b16 %v172
    %v263 = vunpack.c.l.b16 %v173
    %v264 = vunpack.c.l.b16 %v174
    %v265 = vpack.c.b16 %v262, %v261
    %v266 = vpack.c.b16 %v264, %v263
    %269 = vmatprep.subr.bf16.mxu0 0
    %270 = vmatpush1.bf16.msra.mxu0 %v265
    %271 = vmatprep.subr.bf16.mxu0 0
    %272 = vmatpush1.bf16.msra.mxu0 %v266
    %273 = vmatprep.subr.bf16.mxu0 0
    %274 = vmatpush1.bf16.msra.mxu0 0
    %275 = vmatprep.subr.bf16.mxu0 0
    %276 = vmatpush1.bf16.msra.mxu0 0
    %277 = vmatprep.subr.bf16.mxu0 0
    %278 = vmatpush1.bf16.msra.mxu0 0
    %279 = vmatprep.subr.bf16.mxu0 0
    %280 = vmatpush1.bf16.msra.mxu0 0
    %281 = vmatprep.subr.bf16.mxu0 0
    %282 = vmatpush1.bf16.msra.mxu0 0
    %283 = vmatprep.subr.bf16.mxu0 0
    %284 = vmatpush1.bf16.msra.mxu0 0
    %285 = vmatprep.subr.bf16.mxu0 0
    %286 = vmatpush1.bf16.msra.mxu0 0
    %287 = vmatprep.subr.bf16.mxu0 0
    %288 = vmatpush1.bf16.msra.mxu0 0
    %289 = vmatprep.subr.bf16.mxu0 0
    %290 = vmatpush1.bf16.msra.mxu0 0
    %291 = vmatprep.subr.bf16.mxu0 0
    %292 = vmatpush1.bf16.msra.mxu0 0
    %293 = vmatprep.subr.bf16.mxu0 0
    %294 = vmatpush1.bf16.msra.mxu0 0
    %295 = vmatprep.subr.bf16.mxu0 0
    %296 = vmatpush1.bf16.msra.mxu0 0
    %297 = vmatprep.subr.bf16.mxu0 0
    %298 = vmatpush1.bf16.msra.mxu0 0
    %299 = vmatprep.subr.bf16.mxu0 0
    %300 = vmatpush1.bf16.msra.mxu0 0
    %301 = vmatprep.mubr.bf16.mxu0 0
    %302 = vmatmul.mubr.bf16.gmra.mrb[0].mxu0 %v206
    %v303 = vpop.f32.mrb[0].mxu0
    %v304 = vadd.f32 %v255, %v303
    %v305 = vpop.f32.mrb[0].mxu0
    %v306 = vpop.f32.mrb[0].mxu0
    %v307 = vadd.f32 %v255, %v306
    %v308 = vpop.f32.mrb[0].mxu0
    %309 = vdwg.mxu0
    %v311 = vlaneseq
    %v312 = vshrl.u32 %v311, 7
    %v313 = vsub.s32 0, %v312
    %v314 = vrot.slane %v180, %v313
    %v320 = vunpack.c.l.b16 %v176
    %v321 = vunpack.c.l.b16 %v177
    %v322 = vunpack.c.l.b16 %v178
    %v323 = vunpack.c.l.b16 %v179
    %v324 = vpack.c.b16 %v321, %v320
    %v325 = vpack.c.b16 %v323, %v322
    %328 = vmatprep.subr.bf16.mxu0 0
    %329 = vmatpush1.bf16.msra.mxu0 %v324
    %330 = vmatprep.subr.bf16.mxu0 0
    %331 = vmatpush1.bf16.msra.mxu0 %v325
    %332 = vmatprep.subr.bf16.mxu0 0
    %333 = vmatpush1.bf16.msra.mxu0 0
    %334 = vmatprep.subr.bf16.mxu0 0
    %335 = vmatpush1.bf16.msra.mxu0 0
    %336 = vmatprep.subr.bf16.mxu0 0
    %337 = vmatpush1.bf16.msra.mxu0 0
    %338 = vmatprep.subr.bf16.mxu0 0
    %339 = vmatpush1.bf16.msra.mxu0 0
    %340 = vmatprep.subr.bf16.mxu0 0
    %341 = vmatpush1.bf16.msra.mxu0 0
    %342 = vmatprep.subr.bf16.mxu0 0
    %343 = vmatpush1.bf16.msra.mxu0 0
    %344 = vmatprep.subr.bf16.mxu0 0
    %345 = vmatpush1.bf16.msra.mxu0 0
    %346 = vmatprep.subr.bf16.mxu0 0
    %347 = vmatpush1.bf16.msra.mxu0 0
    %348 = vmatprep.subr.bf16.mxu0 0
    %349 = vmatpush1.bf16.msra.mxu0 0
    %350 = vmatprep.subr.bf16.mxu0 0
    %351 = vmatpush1.bf16.msra.mxu0 0
    %352 = vmatprep.subr.bf16.mxu0 0
    %353 = vmatpush1.bf16.msra.mxu0 0
    %354 = vmatprep.subr.bf16.mxu0 0
    %355 = vmatpush1.bf16.msra.mxu0 0
    %356 = vmatprep.subr.bf16.mxu0 0
    %357 = vmatpush1.bf16.msra.mxu0 0
    %358 = vmatprep.subr.bf16.mxu0 0
    %359 = vmatpush1.bf16.msra.mxu0 0
    %360 = vmatprep.mubr.bf16.mxu0 0
    %361 = vmatmul.mubr.bf16.gmra.mrb[0].mxu0 %v206
    %v362 = vpop.f32.mrb[0].mxu0
    %v363 = vadd.f32 %v314, %v362
    %v364 = vpop.f32.mrb[0].mxu0
    %v365 = vpop.f32.mrb[0].mxu0
    %v366 = vadd.f32 %v314, %v365
    %v367 = vpop.f32.mrb[0].mxu0
    %368 = vdwg.mxu0
    %371 = vrot.lane.b32.xlu0 %v249, 120
    %v372 = vpop.permute.xlu0 %371
    %373 = vrot.lane.b32.xlu0 %v250, 120
    %v374 = vpop.permute.xlu0 %373
    %377 = vrot.lane.b32.xlu0 %v249, 112
    %v378 = vpop.permute.xlu0 %377
    %379 = vrot.lane.b32.xlu0 %v250, 112
    %v380 = vpop.permute.xlu0 %379
    %383 = vrot.lane.b32.xlu0 %v249, 104
    %v384 = vpop.permute.xlu0 %383
    %385 = vrot.lane.b32.xlu0 %v250, 104
    %v386 = vpop.permute.xlu0 %385
    %391 = vrot.lane.b32.xlu0 %v304, 120
    %v392 = vpop.permute.xlu0 %391
    %393 = vrot.lane.b32.xlu0 %v307, 120
    %v394 = vpop.permute.xlu0 %393
    %397 = vrot.lane.b32.xlu0 %v304, 112
    %v398 = vpop.permute.xlu0 %397
    %399 = vrot.lane.b32.xlu0 %v307, 112
    %v400 = vpop.permute.xlu0 %399
    %403 = vrot.lane.b32.xlu0 %v304, 104
    %v404 = vpop.permute.xlu0 %403
    %405 = vrot.lane.b32.xlu0 %v307, 104
    %v406 = vpop.permute.xlu0 %405
    %411 = vrot.lane.b32.xlu0 %v363, 120
    %v412 = vpop.permute.xlu0 %411
    %413 = vrot.lane.b32.xlu0 %v366, 120
    %v414 = vpop.permute.xlu0 %413
    %417 = vrot.lane.b32.xlu0 %v363, 112
    %v418 = vpop.permute.xlu0 %417
    %419 = vrot.lane.b32.xlu0 %v366, 112
    %v420 = vpop.permute.xlu0 %419
    %423 = vrot.lane.b32.xlu0 %v363, 104
    %v424 = vpop.permute.xlu0 %423
    %425 = vrot.lane.b32.xlu0 %v366, 104
    %v426 = vpop.permute.xlu0 %425
    %v429 = vpack.c.bf16 %v249, %v249
    %v430 = vpack.c.bf16 %v250, %v250
    %v431 = vpack.c.bf16 %v372, %v372
    %v432 = vpack.c.bf16 %v374, %v374
    %v433 = vpack.c.bf16 %v378, %v378
    %v434 = vpack.c.bf16 %v380, %v380
    %v435 = vpack.c.bf16 %v384, %v384
    %v436 = vpack.c.bf16 %v386, %v386
    %v437 = vpack.c.bf16 %v304, %v304
    %v438 = vpack.c.bf16 %v307, %v307
    %v439 = vpack.c.bf16 %v392, %v392
    %v440 = vpack.c.bf16 %v394, %v394
    %v441 = vpack.c.bf16 %v398, %v398
    %v442 = vpack.c.bf16 %v400, %v400
    %v443 = vpack.c.bf16 %v404, %v404
    %v444 = vpack.c.bf16 %v406, %v406
    %vm445 = vcmask 64512
    %v447 = vsel %vm445, %v429, 0
    %v450 = vsel %vm445, %v437, 0
    %452 = vmatprep.subr.bf16.mxu0 0
    %453 = vmatpush1.bf16.xpose.msra.mxu0 %v450
    %454 = vmatprep.subr.bf16.mxu0 0
    %455 = vmatpush1.bf16.xpose.msra.mxu0 0
    %456 = vmatprep.subr.bf16.mxu0 0
    %457 = vmatpush1.bf16.xpose.msra.mxu0 0
    %458 = vmatprep.subr.bf16.mxu0 0
    %459 = vmatpush1.bf16.xpose.msra.mxu0 0
    %460 = vmatprep.subr.bf16.mxu0 0
    %461 = vmatpush1.bf16.xpose.msra.mxu0 0
    %462 = vmatprep.subr.bf16.mxu0 0
    %463 = vmatpush1.bf16.xpose.msra.mxu0 0
    %464 = vmatprep.subr.bf16.mxu0 0
    %465 = vmatpush1.bf16.xpose.msra.mxu0 0
    %466 = vmatprep.subr.bf16.mxu0 0
    %467 = vmatpush1.bf16.xpose.msra.mxu0 0
    %468 = vmatprep.subr.bf16.mxu0 0
    %469 = vmatpush1.bf16.xpose.msra.mxu0 0
    %470 = vmatprep.subr.bf16.mxu0 0
    %471 = vmatpush1.bf16.xpose.msra.mxu0 0
    %472 = vmatprep.subr.bf16.mxu0 0
    %473 = vmatpush1.bf16.xpose.msra.mxu0 0
    %474 = vmatprep.subr.bf16.mxu0 0
    %475 = vmatpush1.bf16.xpose.msra.mxu0 0
    %476 = vmatprep.subr.bf16.mxu0 0
    %477 = vmatpush1.bf16.xpose.msra.mxu0 0
    %478 = vmatprep.subr.bf16.mxu0 0
    %479 = vmatpush1.bf16.xpose.msra.mxu0 0
    %480 = vmatprep.subr.bf16.mxu0 0
    %481 = vmatpush1.bf16.xpose.msra.mxu0 0
    %482 = vmatprep.subr.bf16.mxu0 0
    %483 = vmatpush1.bf16.xpose.msra.mxu0 0
    %484 = vmatprep.mubr.bf16.mxu0 0
    %485 = vmatmul.mubr.bf16.gmra.mrb[0].mxu0 %v447
    %v486 = vpop.f32.mrb[0].mxu0
    %v487 = vadd.f32 0.0, %v486
    %v488 = vpop.f32.mrb[0].mxu0
    %v489 = vpop.f32.mrb[0].mxu0
    %v490 = vpop.f32.mrb[0].mxu0
    %491 = vdwg.mxu0
    %v493 = vsel %vm445, %v430, 0
    %v496 = vsel %vm445, %v438, 0
    %498 = vmatprep.subr.bf16.mxu0 0
    %499 = vmatpush1.bf16.xpose.msra.mxu0 %v496
    %500 = vmatprep.subr.bf16.mxu0 0
    %501 = vmatpush1.bf16.xpose.msra.mxu0 0
    %502 = vmatprep.subr.bf16.mxu0 0
    %503 = vmatpush1.bf16.xpose.msra.mxu0 0
    %504 = vmatprep.subr.bf16.mxu0 0
    %505 = vmatpush1.bf16.xpose.msra.mxu0 0
    %506 = vmatprep.subr.bf16.mxu0 0
    %507 = vmatpush1.bf16.xpose.msra.mxu0 0
    %508 = vmatprep.subr.bf16.mxu0 0
    %509 = vmatpush1.bf16.xpose.msra.mxu0 0
    %510 = vmatprep.subr.bf16.mxu0 0
    %511 = vmatpush1.bf16.xpose.msra.mxu0 0
    %512 = vmatprep.subr.bf16.mxu0 0
    %513 = vmatpush1.bf16.xpose.msra.mxu0 0
    %514 = vmatprep.subr.bf16.mxu0 0
    %515 = vmatpush1.bf16.xpose.msra.mxu0 0
    %516 = vmatprep.subr.bf16.mxu0 0
    %517 = vmatpush1.bf16.xpose.msra.mxu0 0
    %518 = vmatprep.subr.bf16.mxu0 0
    %519 = vmatpush1.bf16.xpose.msra.mxu0 0
    %520 = vmatprep.subr.bf16.mxu0 0
    %521 = vmatpush1.bf16.xpose.msra.mxu0 0
    %522 = vmatprep.subr.bf16.mxu0 0
    %523 = vmatpush1.bf16.xpose.msra.mxu0 0
    %524 = vmatprep.subr.bf16.mxu0 0
    %525 = vmatpush1.bf16.xpose.msra.mxu0 0
    %526 = vmatprep.subr.bf16.mxu0 0
    %527 = vmatpush1.bf16.xpose.msra.mxu0 0
    %528 = vmatprep.subr.bf16.mxu0 0
    %529 = vmatpush1.bf16.xpose.msra.mxu0 0
    %530 = vmatprep.mubr.bf16.mxu0 0
    %531 = vmatmul.mubr.bf16.gmra.mrb[0].mxu0 %v493
    %v532 = vpop.f32.mrb[0].mxu0
    %v533 = vadd.f32 0.0, %v532
    %v534 = vpop.f32.mrb[0].mxu0
    %v535 = vpop.f32.mrb[0].mxu0
    %v536 = vpop.f32.mrb[0].mxu0
    %537 = vdwg.mxu0
    %v539 = vsel %vm445, %v431, 0
    %v542 = vsel %vm445, %v439, 0
    %544 = vmatprep.subr.bf16.mxu0 0
    %545 = vmatpush1.bf16.xpose.msra.mxu0 %v542
    %546 = vmatprep.subr.bf16.mxu0 0
    %547 = vmatpush1.bf16.xpose.msra.mxu0 0
    %548 = vmatprep.subr.bf16.mxu0 0
    %549 = vmatpush1.bf16.xpose.msra.mxu0 0
    %550 = vmatprep.subr.bf16.mxu0 0
    %551 = vmatpush1.bf16.xpose.msra.mxu0 0
    %552 = vmatprep.subr.bf16.mxu0 0
    %553 = vmatpush1.bf16.xpose.msra.mxu0 0
    %554 = vmatprep.subr.bf16.mxu0 0
    %555 = vmatpush1.bf16.xpose.msra.mxu0 0
    %556 = vmatprep.subr.bf16.mxu0 0
    %557 = vmatpush1.bf16.xpose.msra.mxu0 0
    %558 = vmatprep.subr.bf16.mxu0 0
    %559 = vmatpush1.bf16.xpose.msra.mxu0 0
    %560 = vmatprep.subr.bf16.mxu0 0
    %561 = vmatpush1.bf16.xpose.msra.mxu0 0
    %562 = vmatprep.subr.bf16.mxu0 0
    %563 = vmatpush1.bf16.xpose.msra.mxu0 0
    %564 = vmatprep.subr.bf16.mxu0 0
    %565 = vmatpush1.bf16.xpose.msra.mxu0 0
    %566 = vmatprep.subr.bf16.mxu0 0
    %567 = vmatpush1.bf16.xpose.msra.mxu0 0
    %568 = vmatprep.subr.bf16.mxu0 0
    %569 = vmatpush1.bf16.xpose.msra.mxu0 0
    %570 = vmatprep.subr.bf16.mxu0 0
    %571 = vmatpush1.bf16.xpose.msra.mxu0 0
    %572 = vmatprep.subr.bf16.mxu0 0
    %573 = vmatpush1.bf16.xpose.msra.mxu0 0
    %574 = vmatprep.subr.bf16.mxu0 0
    %575 = vmatpush1.bf16.xpose.msra.mxu0 0
    %576 = vmatprep.mubr.bf16.mxu0 0
    %577 = vmatmul.mubr.bf16.gmra.mrb[0].mxu0 %v539
    %v578 = vpop.f32.mrb[0].mxu0
    %v579 = vadd.f32 0.0, %v578
    %v580 = vpop.f32.mrb[0].mxu0
    %v581 = vpop.f32.mrb[0].mxu0
    %v582 = vpop.f32.mrb[0].mxu0
    %583 = vdwg.mxu0
    %v585 = vsel %vm445, %v432, 0
    %v588 = vsel %vm445, %v440, 0
    %590 = vmatprep.subr.bf16.mxu0 0
    %591 = vmatpush1.bf16.xpose.msra.mxu0 %v588
    %592 = vmatprep.subr.bf16.mxu0 0
    %593 = vmatpush1.bf16.xpose.msra.mxu0 0
    %594 = vmatprep.subr.bf16.mxu0 0
    %595 = vmatpush1.bf16.xpose.msra.mxu0 0
    %596 = vmatprep.subr.bf16.mxu0 0
    %597 = vmatpush1.bf16.xpose.msra.mxu0 0
    %598 = vmatprep.subr.bf16.mxu0 0
    %599 = vmatpush1.bf16.xpose.msra.mxu0 0
    %600 = vmatprep.subr.bf16.mxu0 0
    %601 = vmatpush1.bf16.xpose.msra.mxu0 0
    %602 = vmatprep.subr.bf16.mxu0 0
    %603 = vmatpush1.bf16.xpose.msra.mxu0 0
    %604 = vmatprep.subr.bf16.mxu0 0
    %605 = vmatpush1.bf16.xpose.msra.mxu0 0
    %606 = vmatprep.subr.bf16.mxu0 0
    %607 = vmatpush1.bf16.xpose.msra.mxu0 0
    %608 = vmatprep.subr.bf16.mxu0 0
    %609 = vmatpush1.bf16.xpose.msra.mxu0 0
    %610 = vmatprep.subr.bf16.mxu0 0
    %611 = vmatpush1.bf16.xpose.msra.mxu0 0
    %612 = vmatprep.subr.bf16.mxu0 0
    %613 = vmatpush1.bf16.xpose.msra.mxu0 0
    %614 = vmatprep.subr.bf16.mxu0 0
    %615 = vmatpush1.bf16.xpose.msra.mxu0 0
    %616 = vmatprep.subr.bf16.mxu0 0
    %617 = vmatpush1.bf16.xpose.msra.mxu0 0
    %618 = vmatprep.subr.bf16.mxu0 0
    %619 = vmatpush1.bf16.xpose.msra.mxu0 0
    %620 = vmatprep.subr.bf16.mxu0 0
    %621 = vmatpush1.bf16.xpose.msra.mxu0 0
    %622 = vmatprep.mubr.bf16.mxu0 0
    %623 = vmatmul.mubr.bf16.gmra.mrb[0].mxu0 %v585
    %v624 = vpop.f32.mrb[0].mxu0
    %v625 = vadd.f32 0.0, %v624
    %v626 = vpop.f32.mrb[0].mxu0
    %v627 = vpop.f32.mrb[0].mxu0
    %v628 = vpop.f32.mrb[0].mxu0
    %629 = vdwg.mxu0
    %v631 = vsel %vm445, %v433, 0
    %v634 = vsel %vm445, %v441, 0
    %636 = vmatprep.subr.bf16.mxu0 0
    %637 = vmatpush1.bf16.xpose.msra.mxu0 %v634
    %638 = vmatprep.subr.bf16.mxu0 0
    %639 = vmatpush1.bf16.xpose.msra.mxu0 0
    %640 = vmatprep.subr.bf16.mxu0 0
    %641 = vmatpush1.bf16.xpose.msra.mxu0 0
    %642 = vmatprep.subr.bf16.mxu0 0
    %643 = vmatpush1.bf16.xpose.msra.mxu0 0
    %644 = vmatprep.subr.bf16.mxu0 0
    %645 = vmatpush1.bf16.xpose.msra.mxu0 0
    %646 = vmatprep.subr.bf16.mxu0 0
    %647 = vmatpush1.bf16.xpose.msra.mxu0 0
    %648 = vmatprep.subr.bf16.mxu0 0
    %649 = vmatpush1.bf16.xpose.msra.mxu0 0
    %650 = vmatprep.subr.bf16.mxu0 0
    %651 = vmatpush1.bf16.xpose.msra.mxu0 0
    %652 = vmatprep.subr.bf16.mxu0 0
    %653 = vmatpush1.bf16.xpose.msra.mxu0 0
    %654 = vmatprep.subr.bf16.mxu0 0
    %655 = vmatpush1.bf16.xpose.msra.mxu0 0
    %656 = vmatprep.subr.bf16.mxu0 0
    %657 = vmatpush1.bf16.xpose.msra.mxu0 0
    %658 = vmatprep.subr.bf16.mxu0 0
    %659 = vmatpush1.bf16.xpose.msra.mxu0 0
    %660 = vmatprep.subr.bf16.mxu0 0
    %661 = vmatpush1.bf16.xpose.msra.mxu0 0
    %662 = vmatprep.subr.bf16.mxu0 0
    %663 = vmatpush1.bf16.xpose.msra.mxu0 0
    %664 = vmatprep.subr.bf16.mxu0 0
    %665 = vmatpush1.bf16.xpose.msra.mxu0 0
    %666 = vmatprep.subr.bf16.mxu0 0
    %667 = vmatpush1.bf16.xpose.msra.mxu0 0
    %668 = vmatprep.mubr.bf16.mxu0 0
    %669 = vmatmul.mubr.bf16.gmra.mrb[0].mxu0 %v631
    %v670 = vpop.f32.mrb[0].mxu0
    %v671 = vadd.f32 0.0, %v670
    %v672 = vpop.f32.mrb[0].mxu0
    %v673 = vpop.f32.mrb[0].mxu0
    %v674 = vpop.f32.mrb[0].mxu0
    %675 = vdwg.mxu0
    %v677 = vsel %vm445, %v434, 0
    %v680 = vsel %vm445, %v442, 0
    %682 = vmatprep.subr.bf16.mxu0 0
    %683 = vmatpush1.bf16.xpose.msra.mxu0 %v680
    %684 = vmatprep.subr.bf16.mxu0 0
    %685 = vmatpush1.bf16.xpose.msra.mxu0 0
    %686 = vmatprep.subr.bf16.mxu0 0
    %687 = vmatpush1.bf16.xpose.msra.mxu0 0
    %688 = vmatprep.subr.bf16.mxu0 0
    %689 = vmatpush1.bf16.xpose.msra.mxu0 0
    %690 = vmatprep.subr.bf16.mxu0 0
    %691 = vmatpush1.bf16.xpose.msra.mxu0 0
    %692 = vmatprep.subr.bf16.mxu0 0
    %693 = vmatpush1.bf16.xpose.msra.mxu0 0
    %694 = vmatprep.subr.bf16.mxu0 0
    %695 = vmatpush1.bf16.xpose.msra.mxu0 0
    %696 = vmatprep.subr.bf16.mxu0 0
    %697 = vmatpush1.bf16.xpose.msra.mxu0 0
    %698 = vmatprep.subr.bf16.mxu0 0
    %699 = vmatpush1.bf16.xpose.msra.mxu0 0
    %700 = vmatprep.subr.bf16.mxu0 0
    %701 = vmatpush1.bf16.xpose.msra.mxu0 0
    %702 = vmatprep.subr.bf16.mxu0 0
    %703 = vmatpush1.bf16.xpose.msra.mxu0 0
    %704 = vmatprep.subr.bf16.mxu0 0
    %705 = vmatpush1.bf16.xpose.msra.mxu0 0
    %706 = vmatprep.subr.bf16.mxu0 0
    %707 = vmatpush1.bf16.xpose.msra.mxu0 0
    %708 = vmatprep.subr.bf16.mxu0 0
    %709 = vmatpush1.bf16.xpose.msra.mxu0 0
    %710 = vmatprep.subr.bf16.mxu0 0
    %711 = vmatpush1.bf16.xpose.msra.mxu0 0
    %712 = vmatprep.subr.bf16.mxu0 0
    %713 = vmatpush1.bf16.xpose.msra.mxu0 0
    %714 = vmatprep.mubr.bf16.mxu0 0
    %715 = vmatmul.mubr.bf16.gmra.mrb[0].mxu0 %v677
    %v716 = vpop.f32.mrb[0].mxu0
    %v717 = vadd.f32 0.0, %v716
    %v718 = vpop.f32.mrb[0].mxu0
    %v719 = vpop.f32.mrb[0].mxu0
    %v720 = vpop.f32.mrb[0].mxu0
    %721 = vdwg.mxu0
    %v723 = vsel %vm445, %v435, 0
    %v726 = vsel %vm445, %v443, 0
    %728 = vmatprep.subr.bf16.mxu0 0
    %729 = vmatpush1.bf16.xpose.msra.mxu0 %v726
    %730 = vmatprep.subr.bf16.mxu0 0
    %731 = vmatpush1.bf16.xpose.msra.mxu0 0
    %732 = vmatprep.subr.bf16.mxu0 0
    %733 = vmatpush1.bf16.xpose.msra.mxu0 0
    %734 = vmatprep.subr.bf16.mxu0 0
    %735 = vmatpush1.bf16.xpose.msra.mxu0 0
    %736 = vmatprep.subr.bf16.mxu0 0
    %737 = vmatpush1.bf16.xpose.msra.mxu0 0
    %738 = vmatprep.subr.bf16.mxu0 0
    %739 = vmatpush1.bf16.xpose.msra.mxu0 0
    %740 = vmatprep.subr.bf16.mxu0 0
    %741 = vmatpush1.bf16.xpose.msra.mxu0 0
    %742 = vmatprep.subr.bf16.mxu0 0
    %743 = vmatpush1.bf16.xpose.msra.mxu0 0
    %744 = vmatprep.subr.bf16.mxu0 0
    %745 = vmatpush1.bf16.xpose.msra.mxu0 0
    %746 = vmatprep.subr.bf16.mxu0 0
    %747 = vmatpush1.bf16.xpose.msra.mxu0 0
    %748 = vmatprep.subr.bf16.mxu0 0
    %749 = vmatpush1.bf16.xpose.msra.mxu0 0
    %750 = vmatprep.subr.bf16.mxu0 0
    %751 = vmatpush1.bf16.xpose.msra.mxu0 0
    %752 = vmatprep.subr.bf16.mxu0 0
    %753 = vmatpush1.bf16.xpose.msra.mxu0 0
    %754 = vmatprep.subr.bf16.mxu0 0
    %755 = vmatpush1.bf16.xpose.msra.mxu0 0
    %756 = vmatprep.subr.bf16.mxu0 0
    %757 = vmatpush1.bf16.xpose.msra.mxu0 0
    %758 = vmatprep.subr.bf16.mxu0 0
    %759 = vmatpush1.bf16.xpose.msra.mxu0 0
    %760 = vmatprep.mubr.bf16.mxu0 0
    %761 = vmatmul.mubr.bf16.gmra.mrb[0].mxu0 %v723
    %v762 = vpop.f32.mrb[0].mxu0
    %v763 = vadd.f32 0.0, %v762
    %v764 = vpop.f32.mrb[0].mxu0
    %v765 = vpop.f32.mrb[0].mxu0
    %v766 = vpop.f32.mrb[0].mxu0
    %767 = vdwg.mxu0
    %v769 = vsel %vm445, %v436, 0
    %v772 = vsel %vm445, %v444, 0
    %774 = vmatprep.subr.bf16.mxu0 0
    %775 = vmatpush1.bf16.xpose.msra.mxu0 %v772
    %776 = vmatprep.subr.bf16.mxu0 0
    %777 = vmatpush1.bf16.xpose.msra.mxu0 0
    %778 = vmatprep.subr.bf16.mxu0 0
    %779 = vmatpush1.bf16.xpose.msra.mxu0 0
    %780 = vmatprep.subr.bf16.mxu0 0
    %781 = vmatpush1.bf16.xpose.msra.mxu0 0
    %782 = vmatprep.subr.bf16.mxu0 0
    %783 = vmatpush1.bf16.xpose.msra.mxu0 0
    %784 = vmatprep.subr.bf16.mxu0 0
    %785 = vmatpush1.bf16.xpose.msra.mxu0 0
    %786 = vmatprep.subr.bf16.mxu0 0
    %787 = vmatpush1.bf16.xpose.msra.mxu0 0
    %788 = vmatprep.subr.bf16.mxu0 0
    %789 = vmatpush1.bf16.xpose.msra.mxu0 0
    %790 = vmatprep.subr.bf16.mxu0 0
    %791 = vmatpush1.bf16.xpose.msra.mxu0 0
    %792 = vmatprep.subr.bf16.mxu0 0
    %793 = vmatpush1.bf16.xpose.msra.mxu0 0
    %794 = vmatprep.subr.bf16.mxu0 0
    %795 = vmatpush1.bf16.xpose.msra.mxu0 0
    %796 = vmatprep.subr.bf16.mxu0 0
    %797 = vmatpush1.bf16.xpose.msra.mxu0 0
    %798 = vmatprep.subr.bf16.mxu0 0
    %799 = vmatpush1.bf16.xpose.msra.mxu0 0
    %800 = vmatprep.subr.bf16.mxu0 0
    %801 = vmatpush1.bf16.xpose.msra.mxu0 0
    %802 = vmatprep.subr.bf16.mxu0 0
    %803 = vmatpush1.bf16.xpose.msra.mxu0 0
    %804 = vmatprep.subr.bf16.mxu0 0
    %805 = vmatpush1.bf16.xpose.msra.mxu0 0
    %806 = vmatprep.mubr.bf16.mxu0 0
    %807 = vmatmul.mubr.bf16.gmra.mrb[0].mxu0 %v769
    %v808 = vpop.f32.mrb[0].mxu0
    %v809 = vadd.f32 0.0, %v808
    %v810 = vpop.f32.mrb[0].mxu0
    %v811 = vpop.f32.mrb[0].mxu0
    %v812 = vpop.f32.mrb[0].mxu0
    %813 = vdwg.mxu0
    %v814 = vsel %vm445, %v487, -inf
    %815 = vmax.xlane.f32.xlu0 %v814
    %v816 = vpop.xlane.xlu0 %815
    %v817 = vsel %vm445, %v533, -inf
    %818 = vmax.xlane.f32.xlu0 %v817
    %v819 = vpop.xlane.xlu0 %818
    %v820 = vsel %vm445, %v579, -inf
    %821 = vmax.xlane.f32.xlu0 %v820
    %v822 = vpop.xlane.xlu0 %821
    %v823 = vsel %vm445, %v625, -inf
    %824 = vmax.xlane.f32.xlu0 %v823
    %v825 = vpop.xlane.xlu0 %824
    %v826 = vsel %vm445, %v671, -inf
    %827 = vmax.xlane.f32.xlu0 %v826
    %v828 = vpop.xlane.xlu0 %827
    %v829 = vsel %vm445, %v717, -inf
    %830 = vmax.xlane.f32.xlu0 %v829
    %v831 = vpop.xlane.xlu0 %830
    %v832 = vsel %vm445, %v763, -inf
    %833 = vmax.xlane.f32.xlu0 %v832
    %v834 = vpop.xlane.xlu0 %833
    %v835 = vsel %vm445, %v809, -inf
    %836 = vmax.xlane.f32.xlu0 %v835
    %v837 = vpop.xlane.xlu0 %836
    %v838 = vsub.f32 %v487, %v816
    %v839 = vsub.f32 %v533, %v819
    %v840 = vsub.f32 %v579, %v822
    %v841 = vsub.f32 %v625, %v825
    %v842 = vsub.f32 %v671, %v828
    %v843 = vsub.f32 %v717, %v831
    %v844 = vsub.f32 %v763, %v834
    %v845 = vsub.f32 %v809, %v837
    %v846 = vmul.f32 %v838, 1.442695
    %v847 = vpow.pop %v846
    %v848 = vmul.f32 %v839, 1.442695
    %v849 = vpow.pop %v848
    %v850 = vmul.f32 %v840, 1.442695
    %v851 = vpow.pop %v850
    %v852 = vmul.f32 %v841, 1.442695
    %v853 = vpow.pop %v852
    %v854 = vmul.f32 %v842, 1.442695
    %v855 = vpow.pop %v854
    %v856 = vmul.f32 %v843, 1.442695
    %v857 = vpow.pop %v856
    %v858 = vmul.f32 %v844, 1.442695
    %v859 = vpow.pop %v858
    %v860 = vmul.f32 %v845, 1.442695
    %v861 = vpow.pop %v860
    %v862 = vsel %vm445, %v847, 0.0
    %863 = vadd.xlane.f32.xlu0 %v862
    %v864 = vpop.xlane.xlu0 %863
    %v865 = vsel %vm445, %v849, 0.0
    %866 = vadd.xlane.f32.xlu0 %v865
    %v867 = vpop.xlane.xlu0 %866
    %v868 = vsel %vm445, %v851, 0.0
    %869 = vadd.xlane.f32.xlu0 %v868
    %v870 = vpop.xlane.xlu0 %869
    %v871 = vsel %vm445, %v853, 0.0
    %872 = vadd.xlane.f32.xlu0 %v871
    %v873 = vpop.xlane.xlu0 %872
    %v874 = vsel %vm445, %v855, 0.0
    %875 = vadd.xlane.f32.xlu0 %v874
    %v876 = vpop.xlane.xlu0 %875
    %v877 = vsel %vm445, %v857, 0.0
    %878 = vadd.xlane.f32.xlu0 %v877
    %v879 = vpop.xlane.xlu0 %878
    %v880 = vsel %vm445, %v859, 0.0
    %881 = vadd.xlane.f32.xlu0 %v880
    %v882 = vpop.xlane.xlu0 %881
    %v883 = vsel %vm445, %v861, 0.0
    %884 = vadd.xlane.f32.xlu0 %v883
    %v885 = vpop.xlane.xlu0 %884
    %v886 = vrcp.pop %v864
    %v887 = vmul.f32 %v847, %v886
    %v888 = vrcp.pop %v867
    %v889 = vmul.f32 %v849, %v888
    %v890 = vrcp.pop %v870
    %v891 = vmul.f32 %v851, %v890
    %v892 = vrcp.pop %v873
    %v893 = vmul.f32 %v853, %v892
    %v894 = vrcp.pop %v876
    %v895 = vmul.f32 %v855, %v894
    %v896 = vrcp.pop %v879
    %v897 = vmul.f32 %v857, %v896
    %v898 = vrcp.pop %v882
    %v899 = vmul.f32 %v859, %v898
    %v900 = vrcp.pop %v885
    %v901 = vmul.f32 %v861, %v900
    %v902 = vpack.c.bf16 %v887, %v887
    %v903 = vpack.c.bf16 %v889, %v889
    %v904 = vpack.c.bf16 %v891, %v891
    %v905 = vpack.c.bf16 %v893, %v893
    %v906 = vpack.c.bf16 %v895, %v895
    %v907 = vpack.c.bf16 %v897, %v897
    %v908 = vpack.c.bf16 %v899, %v899
    %v909 = vpack.c.bf16 %v901, %v901
    %v910 = vpack.c.bf16 %v363, %v363
    %v911 = vpack.c.bf16 %v366, %v366
    %v912 = vpack.c.bf16 %v412, %v412
    %v913 = vpack.c.bf16 %v414, %v414
    %v914 = vpack.c.bf16 %v418, %v418
    %v915 = vpack.c.bf16 %v420, %v420
    %v916 = vpack.c.bf16 %v424, %v424
    %v917 = vpack.c.bf16 %v426, %v426
    %v919 = vsel %vm445, %v902, 0
    %vm921 = vcmask 1043456
    %v923 = vsel %vm921, %v910, 0
    %925 = vmatprep.subr.bf16.mxu0 0
    %926 = vmatpush1.bf16.msra.mxu0 %v923
    %927 = vmatprep.subr.bf16.mxu0 0
    %928 = vmatpush1.bf16.msra.mxu0 0
    %929 = vmatprep.subr.bf16.mxu0 0
    %930 = vmatpush1.bf16.msra.mxu0 0
    %931 = vmatprep.subr.bf16.mxu0 0
    %932 = vmatpush1.bf16.msra.mxu0 0
    %933 = vmatprep.subr.bf16.mxu0 0
    %934 = vmatpush1.bf16.msra.mxu0 0
    %935 = vmatprep.subr.bf16.mxu0 0
    %936 = vmatpush1.bf16.msra.mxu0 0
    %937 = vmatprep.subr.bf16.mxu0 0
    %938 = vmatpush1.bf16.msra.mxu0 0
    %939 = vmatprep.subr.bf16.mxu0 0
    %940 = vmatpush1.bf16.msra.mxu0 0
    %941 = vmatprep.subr.bf16.mxu0 0
    %942 = vmatpush1.bf16.msra.mxu0 0
    %943 = vmatprep.subr.bf16.mxu0 0
    %944 = vmatpush1.bf16.msra.mxu0 0
    %945 = vmatprep.subr.bf16.mxu0 0
    %946 = vmatpush1.bf16.msra.mxu0 0
    %947 = vmatprep.subr.bf16.mxu0 0
    %948 = vmatpush1.bf16.msra.mxu0 0
    %949 = vmatprep.subr.bf16.mxu0 0
    %950 = vmatpush1.bf16.msra.mxu0 0
    %951 = vmatprep.subr.bf16.mxu0 0
    %952 = vmatpush1.bf16.msra.mxu0 0
    %953 = vmatprep.subr.bf16.mxu0 0
    %954 = vmatpush1.bf16.msra.mxu0 0
    %955 = vmatprep.subr.bf16.mxu0 0
    %956 = vmatpush1.bf16.msra.mxu0 0
    %957 = vmatprep.mubr.bf16.mxu0 0
    %958 = vmatmul.mubr.bf16.gmra.mrb[0].mxu0 %v919
    %v959 = vpop.f32.mrb[0].mxu0
    %v960 = vadd.f32 0.0, %v959
    %v961 = vpop.f32.mrb[0].mxu0
    %v962 = vpop.f32.mrb[0].mxu0
    %v963 = vpop.f32.mrb[0].mxu0
    %964 = vdwg.mxu0
    %v966 = vsel %vm445, %v903, 0
    %v969 = vsel %vm921, %v911, 0
    %971 = vmatprep.subr.bf16.mxu0 0
    %972 = vmatpush1.bf16.msra.mxu0 %v969
    %973 = vmatprep.subr.bf16.mxu0 0
    %974 = vmatpush1.bf16.msra.mxu0 0
    %975 = vmatprep.subr.bf16.mxu0 0
    %976 = vmatpush1.bf16.msra.mxu0 0
    %977 = vmatprep.subr.bf16.mxu0 0
    %978 = vmatpush1.bf16.msra.mxu0 0
    %979 = vmatprep.subr.bf16.mxu0 0
    %980 = vmatpush1.bf16.msra.mxu0 0
    %981 = vmatprep.subr.bf16.mxu0 0
    %982 = vmatpush1.bf16.msra.mxu0 0
    %983 = vmatprep.subr.bf16.mxu0 0
    %984 = vmatpush1.bf16.msra.mxu0 0
    %985 = vmatprep.subr.bf16.mxu0 0
    %986 = vmatpush1.bf16.msra.mxu0 0
    %987 = vmatprep.subr.bf16.mxu0 0
    %988 = vmatpush1.bf16.msra.mxu0 0
    %989 = vmatprep.subr.bf16.mxu0 0
    %990 = vmatpush1.bf16.msra.mxu0 0
    %991 = vmatprep.subr.bf16.mxu0 0
    %992 = vmatpush1.bf16.msra.mxu0 0
    %993 = vmatprep.subr.bf16.mxu0 0
    %994 = vmatpush1.bf16.msra.mxu0 0
    %995 = vmatprep.subr.bf16.mxu0 0
    %996 = vmatpush1.bf16.msra.mxu0 0
    %997 = vmatprep.subr.bf16.mxu0 0
    %998 = vmatpush1.bf16.msra.mxu0 0
    %999 = vmatprep.subr.bf16.mxu0 0
    %1000 = vmatpush1.bf16.msra.mxu0 0
    %1001 = vmatprep.subr.bf16.mxu0 0
    %1002 = vmatpush1.bf16.msra.mxu0 0
    %1003 = vmatprep.mubr.bf16.mxu0 0
    %1004 = vmatmul.mubr.bf16.gmra.mrb[0].mxu0 %v966
    %v1005 = vpop.f32.mrb[0].mxu0
    %v1006 = vadd.f32 0.0, %v1005
    %v1007 = vpop.f32.mrb[0].mxu0
    %v1008 = vpop.f32.mrb[0].mxu0
    %v1009 = vpop.f32.mrb[0].mxu0
    %1010 = vdwg.mxu0
    %v1012 = vsel %vm445, %v904, 0
    %v1015 = vsel %vm921, %v912, 0
    %1017 = vmatprep.subr.bf16.mxu0 0
    %1018 = vmatpush1.bf16.msra.mxu0 %v1015
    %1019 = vmatprep.subr.bf16.mxu0 0
    %1020 = vmatpush1.bf16.msra.mxu0 0
    %1021 = vmatprep.subr.bf16.mxu0 0
    %1022 = vmatpush1.bf16.msra.mxu0 0
    %1023 = vmatprep.subr.bf16.mxu0 0
    %1024 = vmatpush1.bf16.msra.mxu0 0
    %1025 = vmatprep.subr.bf16.mxu0 0
    %1026 = vmatpush1.bf16.msra.mxu0 0
    %1027 = vmatprep.subr.bf16.mxu0 0
    %1028 = vmatpush1.bf16.msra.mxu0 0
    %1029 = vmatprep.subr.bf16.mxu0 0
    %1030 = vmatpush1.bf16.msra.mxu0 0
    %1031 = vmatprep.subr.bf16.mxu0 0
    %1032 = vmatpush1.bf16.msra.mxu0 0
    %1033 = vmatprep.subr.bf16.mxu0 0
    %1034 = vmatpush1.bf16.msra.mxu0 0
    %1035 = vmatprep.subr.bf16.mxu0 0
    %1036 = vmatpush1.bf16.msra.mxu0 0
    %1037 = vmatprep.subr.bf16.mxu0 0
    %1038 = vmatpush1.bf16.msra.mxu0 0
    %1039 = vmatprep.subr.bf16.mxu0 0
    %1040 = vmatpush1.bf16.msra.mxu0 0
    %1041 = vmatprep.subr.bf16.mxu0 0
    %1042 = vmatpush1.bf16.msra.mxu0 0
    %1043 = vmatprep.subr.bf16.mxu0 0
    %1044 = vmatpush1.bf16.msra.mxu0 0
    %1045 = vmatprep.subr.bf16.mxu0 0
    %1046 = vmatpush1.bf16.msra.mxu0 0
    %1047 = vmatprep.subr.bf16.mxu0 0
    %1048 = vmatpush1.bf16.msra.mxu0 0
    %1049 = vmatprep.mubr.bf16.mxu0 0
    %1050 = vmatmul.mubr.bf16.gmra.mrb[0].mxu0 %v1012
    %v1051 = vpop.f32.mrb[0].mxu0
    %v1052 = vadd.f32 0.0, %v1051
    %v1053 = vpop.f32.mrb[0].mxu0
    %v1054 = vpop.f32.mrb[0].mxu0
    %v1055 = vpop.f32.mrb[0].mxu0
    %1056 = vdwg.mxu0
    %v1058 = vsel %vm445, %v905, 0
    %v1061 = vsel %vm921, %v913, 0
    %1063 = vmatprep.subr.bf16.mxu0 0
    %1064 = vmatpush1.bf16.msra.mxu0 %v1061
    %1065 = vmatprep.subr.bf16.mxu0 0
    %1066 = vmatpush1.bf16.msra.mxu0 0
    %1067 = vmatprep.subr.bf16.mxu0 0
    %1068 = vmatpush1.bf16.msra.mxu0 0
    %1069 = vmatprep.subr.bf16.mxu0 0
    %1070 = vmatpush1.bf16.msra.mxu0 0
    %1071 = vmatprep.subr.bf16.mxu0 0
    %1072 = vmatpush1.bf16.msra.mxu0 0
    %1073 = vmatprep.subr.bf16.mxu0 0
    %1074 = vmatpush1.bf16.msra.mxu0 0
    %1075 = vmatprep.subr.bf16.mxu0 0
    %1076 = vmatpush1.bf16.msra.mxu0 0
    %1077 = vmatprep.subr.bf16.mxu0 0
    %1078 = vmatpush1.bf16.msra.mxu0 0
    %1079 = vmatprep.subr.bf16.mxu0 0
    %1080 = vmatpush1.bf16.msra.mxu0 0
    %1081 = vmatprep.subr.bf16.mxu0 0
    %1082 = vmatpush1.bf16.msra.mxu0 0
    %1083 = vmatprep.subr.bf16.mxu0 0
    %1084 = vmatpush1.bf16.msra.mxu0 0
    %1085 = vmatprep.subr.bf16.mxu0 0
    %1086 = vmatpush1.bf16.msra.mxu0 0
    %1087 = vmatprep.subr.bf16.mxu0 0
    %1088 = vmatpush1.bf16.msra.mxu0 0
    %1089 = vmatprep.subr.bf16.mxu0 0
    %1090 = vmatpush1.bf16.msra.mxu0 0
    %1091 = vmatprep.subr.bf16.mxu0 0
    %1092 = vmatpush1.bf16.msra.mxu0 0
    %1093 = vmatprep.subr.bf16.mxu0 0
    %1094 = vmatpush1.bf16.msra.mxu0 0
    %1095 = vmatprep.mubr.bf16.mxu0 0
    %1096 = vmatmul.mubr.bf16.gmra.mrb[0].mxu0 %v1058
    %v1097 = vpop.f32.mrb[0].mxu0
    %v1098 = vadd.f32 0.0, %v1097
    %v1099 = vpop.f32.mrb[0].mxu0
    %v1100 = vpop.f32.mrb[0].mxu0
    %v1101 = vpop.f32.mrb[0].mxu0
    %1102 = vdwg.mxu0
    %v1104 = vsel %vm445, %v906, 0
    %v1107 = vsel %vm921, %v914, 0
    %1109 = vmatprep.subr.bf16.mxu0 0
    %1110 = vmatpush1.bf16.msra.mxu0 %v1107
    %1111 = vmatprep.subr.bf16.mxu0 0
    %1112 = vmatpush1.bf16.msra.mxu0 0
    %1113 = vmatprep.subr.bf16.mxu0 0
    %1114 = vmatpush1.bf16.msra.mxu0 0
    %1115 = vmatprep.subr.bf16.mxu0 0
    %1116 = vmatpush1.bf16.msra.mxu0 0
    %1117 = vmatprep.subr.bf16.mxu0 0
    %1118 = vmatpush1.bf16.msra.mxu0 0
    %1119 = vmatprep.subr.bf16.mxu0 0
    %1120 = vmatpush1.bf16.msra.mxu0 0
    %1121 = vmatprep.subr.bf16.mxu0 0
    %1122 = vmatpush1.bf16.msra.mxu0 0
    %1123 = vmatprep.subr.bf16.mxu0 0
    %1124 = vmatpush1.bf16.msra.mxu0 0
    %1125 = vmatprep.subr.bf16.mxu0 0
    %1126 = vmatpush1.bf16.msra.mxu0 0
    %1127 = vmatprep.subr.bf16.mxu0 0
    %1128 = vmatpush1.bf16.msra.mxu0 0
    %1129 = vmatprep.subr.bf16.mxu0 0
    %1130 = vmatpush1.bf16.msra.mxu0 0
    %1131 = vmatprep.subr.bf16.mxu0 0
    %1132 = vmatpush1.bf16.msra.mxu0 0
    %1133 = vmatprep.subr.bf16.mxu0 0
    %1134 = vmatpush1.bf16.msra.mxu0 0
    %1135 = vmatprep.subr.bf16.mxu0 0
    %1136 = vmatpush1.bf16.msra.mxu0 0
    %1137 = vmatprep.subr.bf16.mxu0 0
    %1138 = vmatpush1.bf16.msra.mxu0 0
    %1139 = vmatprep.subr.bf16.mxu0 0
    %1140 = vmatpush1.bf16.msra.mxu0 0
    %1141 = vmatprep.mubr.bf16.mxu0 0
    %1142 = vmatmul.mubr.bf16.gmra.mrb[0].mxu0 %v1104
    %v1143 = vpop.f32.mrb[0].mxu0
    %v1144 = vadd.f32 0.0, %v1143
    %v1145 = vpop.f32.mrb[0].mxu0
    %v1146 = vpop.f32.mrb[0].mxu0
    %v1147 = vpop.f32.mrb[0].mxu0
    %1148 = vdwg.mxu0
    %v1150 = vsel %vm445, %v907, 0
    %v1153 = vsel %vm921, %v915, 0
    %1155 = vmatprep.subr.bf16.mxu0 0
    %1156 = vmatpush1.bf16.msra.mxu0 %v1153
    %1157 = vmatprep.subr.bf16.mxu0 0
    %1158 = vmatpush1.bf16.msra.mxu0 0
    %1159 = vmatprep.subr.bf16.mxu0 0
    %1160 = vmatpush1.bf16.msra.mxu0 0
    %1161 = vmatprep.subr.bf16.mxu0 0
    %1162 = vmatpush1.bf16.msra.mxu0 0
    %1163 = vmatprep.subr.bf16.mxu0 0
    %1164 = vmatpush1.bf16.msra.mxu0 0
    %1165 = vmatprep.subr.bf16.mxu0 0
    %1166 = vmatpush1.bf16.msra.mxu0 0
    %1167 = vmatprep.subr.bf16.mxu0 0
    %1168 = vmatpush1.bf16.msra.mxu0 0
    %1169 = vmatprep.subr.bf16.mxu0 0
    %1170 = vmatpush1.bf16.msra.mxu0 0
    %1171 = vmatprep.subr.bf16.mxu0 0
    %1172 = vmatpush1.bf16.msra.mxu0 0
    %1173 = vmatprep.subr.bf16.mxu0 0
    %1174 = vmatpush1.bf16.msra.mxu0 0
    %1175 = vmatprep.subr.bf16.mxu0 0
    %1176 = vmatpush1.bf16.msra.mxu0 0
    %1177 = vmatprep.subr.bf16.mxu0 0
    %1178 = vmatpush1.bf16.msra.mxu0 0
    %1179 = vmatprep.subr.bf16.mxu0 0
    %1180 = vmatpush1.bf16.msra.mxu0 0
    %1181 = vmatprep.subr.bf16.mxu0 0
    %1182 = vmatpush1.bf16.msra.mxu0 0
    %1183 = vmatprep.subr.bf16.mxu0 0
    %1184 = vmatpush1.bf16.msra.mxu0 0
    %1185 = vmatprep.subr.bf16.mxu0 0
    %1186 = vmatpush1.bf16.msra.mxu0 0
    %1187 = vmatprep.mubr.bf16.mxu0 0
    %1188 = vmatmul.mubr.bf16.gmra.mrb[0].mxu0 %v1150
    %v1189 = vpop.f32.mrb[0].mxu0
    %v1190 = vadd.f32 0.0, %v1189
    %v1191 = vpop.f32.mrb[0].mxu0
    %v1192 = vpop.f32.mrb[0].mxu0
    %v1193 = vpop.f32.mrb[0].mxu0
    %1194 = vdwg.mxu0
    %v1196 = vsel %vm445, %v908, 0
    %v1199 = vsel %vm921, %v916, 0
    %1201 = vmatprep.subr.bf16.mxu0 0
    %1202 = vmatpush1.bf16.msra.mxu0 %v1199
    %1203 = vmatprep.subr.bf16.mxu0 0
    %1204 = vmatpush1.bf16.msra.mxu0 0
    %1205 = vmatprep.subr.bf16.mxu0 0
    %1206 = vmatpush1.bf16.msra.mxu0 0
    %1207 = vmatprep.subr.bf16.mxu0 0
    %1208 = vmatpush1.bf16.msra.mxu0 0
    %1209 = vmatprep.subr.bf16.mxu0 0
    %1210 = vmatpush1.bf16.msra.mxu0 0
    %1211 = vmatprep.subr.bf16.mxu0 0
    %1212 = vmatpush1.bf16.msra.mxu0 0
    %1213 = vmatprep.subr.bf16.mxu0 0
    %1214 = vmatpush1.bf16.msra.mxu0 0
    %1215 = vmatprep.subr.bf16.mxu0 0
    %1216 = vmatpush1.bf16.msra.mxu0 0
    %1217 = vmatprep.subr.bf16.mxu0 0
    %1218 = vmatpush1.bf16.msra.mxu0 0
    %1219 = vmatprep.subr.bf16.mxu0 0
    %1220 = vmatpush1.bf16.msra.mxu0 0
    %1221 = vmatprep.subr.bf16.mxu0 0
    %1222 = vmatpush1.bf16.msra.mxu0 0
    %1223 = vmatprep.subr.bf16.mxu0 0
    %1224 = vmatpush1.bf16.msra.mxu0 0
    %1225 = vmatprep.subr.bf16.mxu0 0
    %1226 = vmatpush1.bf16.msra.mxu0 0
    %1227 = vmatprep.subr.bf16.mxu0 0
    %1228 = vmatpush1.bf16.msra.mxu0 0
    %1229 = vmatprep.subr.bf16.mxu0 0
    %1230 = vmatpush1.bf16.msra.mxu0 0
    %1231 = vmatprep.subr.bf16.mxu0 0
    %1232 = vmatpush1.bf16.msra.mxu0 0
    %1233 = vmatprep.mubr.bf16.mxu0 0
    %1234 = vmatmul.mubr.bf16.gmra.mrb[0].mxu0 %v1196
    %v1235 = vpop.f32.mrb[0].mxu0
    %v1236 = vadd.f32 0.0, %v1235
    %v1237 = vpop.f32.mrb[0].mxu0
    %v1238 = vpop.f32.mrb[0].mxu0
    %v1239 = vpop.f32.mrb[0].mxu0
    %1240 = vdwg.mxu0
    %v1242 = vsel %vm445, %v909, 0
    %v1245 = vsel %vm921, %v917, 0
    %1247 = vmatprep.subr.bf16.mxu0 0
    %1248 = vmatpush1.bf16.msra.mxu0 %v1245
    %1249 = vmatprep.subr.bf16.mxu0 0
    %1250 = vmatpush1.bf16.msra.mxu0 0
    %1251 = vmatprep.subr.bf16.mxu0 0
    %1252 = vmatpush1.bf16.msra.mxu0 0
    %1253 = vmatprep.subr.bf16.mxu0 0
    %1254 = vmatpush1.bf16.msra.mxu0 0
    %1255 = vmatprep.subr.bf16.mxu0 0
    %1256 = vmatpush1.bf16.msra.mxu0 0
    %1257 = vmatprep.subr.bf16.mxu0 0
    %1258 = vmatpush1.bf16.msra.mxu0 0
    %1259 = vmatprep.subr.bf16.mxu0 0
    %1260 = vmatpush1.bf16.msra.mxu0 0
    %1261 = vmatprep.subr.bf16.mxu0 0
    %1262 = vmatpush1.bf16.msra.mxu0 0
    %1263 = vmatprep.subr.bf16.mxu0 0
    %1264 = vmatpush1.bf16.msra.mxu0 0
    %1265 = vmatprep.subr.bf16.mxu0 0
    %1266 = vmatpush1.bf16.msra.mxu0 0
    %1267 = vmatprep.subr.bf16.mxu0 0
    %1268 = vmatpush1.bf16.msra.mxu0 0
    %1269 = vmatprep.subr.bf16.mxu0 0
    %1270 = vmatpush1.bf16.msra.mxu0 0
    %1271 = vmatprep.subr.bf16.mxu0 0
    %1272 = vmatpush1.bf16.msra.mxu0 0
    %1273 = vmatprep.subr.bf16.mxu0 0
    %1274 = vmatpush1.bf16.msra.mxu0 0
    %1275 = vmatprep.subr.bf16.mxu0 0
    %1276 = vmatpush1.bf16.msra.mxu0 0
    %1277 = vmatprep.subr.bf16.mxu0 0
    %1278 = vmatpush1.bf16.msra.mxu0 0
    %1279 = vmatprep.mubr.bf16.mxu0 0
    %1280 = vmatmul.mubr.bf16.gmra.mrb[0].mxu0 %v1242
    %v1281 = vpop.f32.mrb[0].mxu0
    %v1282 = vadd.f32 0.0, %v1281
    %v1283 = vpop.f32.mrb[0].mxu0
    %v1284 = vpop.f32.mrb[0].mxu0
    %v1285 = vpop.f32.mrb[0].mxu0
    %1286 = vdwg.mxu0
    %1289 = vrot.lane.b32.xlu0 %v1052, 8
    %v1290 = vpop.permute.xlu0 %1289
    %1291 = vrot.lane.b32.xlu0 %v1098, 8
    %v1292 = vpop.permute.xlu0 %1291
    %1297 = vrot.lane.b32.xlu0 %v1144, 16
    %v1298 = vpop.permute.xlu0 %1297
    %1299 = vrot.lane.b32.xlu0 %v1190, 16
    %v1300 = vpop.permute.xlu0 %1299
    %1305 = vrot.lane.b32.xlu0 %v1236, 24
    %v1306 = vpop.permute.xlu0 %1305
    %1307 = vrot.lane.b32.xlu0 %v1282, 24
    %v1308 = vpop.permute.xlu0 %1307
    %v1311 = vsel %vm445, %v960, %v1290
    %v1312 = vsel %vm445, %v1006, %v1292
    %vm1313 = vcmask 130048
    %v1314 = vsel %vm1313, %v1311, %v1298
    %v1315 = vsel %vm1313, %v1312, %v1300
    %vm1316 = vcmask 195584
    %v1317 = vsel %vm1316, %v1314, %v1306
    %v1318 = vsel %vm1316, %v1315, %v1308
    %v1319 = vpack.c.bf16 %v1318, %v1317
    %v1321 = vlaneseq
    %v1322 = vshrl.u32 %v1321, 7
    %v1323 = vsub.s32 0, %v1322
    %v1324 = vrot.slane %v185, %v1323
    %v1330 = vunpack.c.l.b16 %v181
    %v1331 = vunpack.c.l.b16 %v182
    %v1332 = vunpack.c.l.b16 %v183
    %v1333 = vunpack.c.l.b16 %v184
    %v1334 = vpack.c.b16 %v1331, %v1330
    %v1335 = vpack.c.b16 %v1333, %v1332
    %v1339 = vsel %vm122, %v1319, 0
    %1341 = vmatprep.subr.bf16.mxu0 0
    %1342 = vmatpush1.bf16.msra.mxu0 %v1334
    %1343 = vmatprep.subr.bf16.mxu0 0
    %1344 = vmatpush1.bf16.msra.mxu0 %v1335
    %1345 = vmatprep.subr.bf16.mxu0 0
    %1346 = vmatpush1.bf16.msra.mxu0 0
    %1347 = vmatprep.subr.bf16.mxu0 0
    %1348 = vmatpush1.bf16.msra.mxu0 0
    %1349 = vmatprep.subr.bf16.mxu0 0
    %1350 = vmatpush1.bf16.msra.mxu0 0
    %1351 = vmatprep.subr.bf16.mxu0 0
    %1352 = vmatpush1.bf16.msra.mxu0 0
    %1353 = vmatprep.subr.bf16.mxu0 0
    %1354 = vmatpush1.bf16.msra.mxu0 0
    %1355 = vmatprep.subr.bf16.mxu0 0
    %1356 = vmatpush1.bf16.msra.mxu0 0
    %1357 = vmatprep.subr.bf16.mxu0 0
    %1358 = vmatpush1.bf16.msra.mxu0 0
    %1359 = vmatprep.subr.bf16.mxu0 0
    %1360 = vmatpush1.bf16.msra.mxu0 0
    %1361 = vmatprep.subr.bf16.mxu0 0
    %1362 = vmatpush1.bf16.msra.mxu0 0
    %1363 = vmatprep.subr.bf16.mxu0 0
    %1364 = vmatpush1.bf16.msra.mxu0 0
    %1365 = vmatprep.subr.bf16.mxu0 0
    %1366 = vmatpush1.bf16.msra.mxu0 0
    %1367 = vmatprep.subr.bf16.mxu0 0
    %1368 = vmatpush1.bf16.msra.mxu0 0
    %1369 = vmatprep.subr.bf16.mxu0 0
    %1370 = vmatpush1.bf16.msra.mxu0 0
    %1371 = vmatprep.subr.bf16.mxu0 0
    %1372 = vmatpush1.bf16.msra.mxu0 0
    %1373 = vmatprep.mubr.bf16.mxu0 0
    %1374 = vmatmul.mubr.bf16.gmra.mrb[0].mxu0 %v1339
    %v1375 = vpop.f32.mrb[0].mxu0
    %v1376 = vadd.f32 %v1324, %v1375
    %v1377 = vpop.f32.mrb[0].mxu0
    %v1378 = vpop.f32.mrb[0].mxu0
    %v1379 = vadd.f32 %v1324, %v1378
    %v1380 = vpop.f32.mrb[0].mxu0
    %1381 = vdwg.mxu0
    %v1382 = vadd.f32 %v118, %v1376
    %v1383 = vadd.f32 %v119, %v1379
    %v1384 = vpack.c.bf16 %v1383, %v1382
    %v1386 = vunpack.c.l.b16 %v1384
    %v1387 = vunpack.c.h.b16 %v1384
    %v1388 = vpack.c.b16 %v1386, %v1386
    %v1389 = vpack.c.b16 %v1387, %v1387
    %vm1392 = vcmask 257024
    %1393 = vst.msk [vmem:[#allocation13] sm:$0xf] %vm1392, %v1388
    %1394 = vst.msk [vmem:[#allocation13 + $0x4] sm:$0xf] %vm1392, %v1389
    // Predicated region
    $region70: #{tpu_custom_call.1} parent=1 // pred_check
      _
    $region71: #{tpu_custom_call.1} parent=1 // pred_check_branch
      %1396 = sbr.rel (0) target = $region73
    $region72: #{tpu_custom_call.1} parent=1 // pred_region
      %s1398 = ssub.s32 128, 128
      %1399 = vsyncadd [#allocation4], %s1398
      %s1400 = sshll.u32 [#allocation13], 4
      %s1401 = int_to_ptr.vmem [resolvable:$true] %s1400
      %1406 = dma.vmem_to_hbm [thread:$0]  %s1401, 128, %s11, [#allocation4], 64, 64, 4
    $region73: #{tpu_custom_call.1} parent=1 // pred_fallthru
      _
    // Predicated region
    $region74: #{tpu_custom_call.1} parent=1 // pred_check
      _
    $region75: #{tpu_custom_call.1} parent=1 // pred_check_branch
      %1408 = sbr.rel (0) target = $region77
    $region76: #{tpu_custom_call.1} parent=1 // pred_region
      %1409 = dma.done [#allocation4], 128
    $region77: #{tpu_custom_call.1} parent=1 // pred_fallthru
      _
    %1410 = vsyncpa [#allocation3], 1
    %1411 = vsyncpa [#allocation6], 1
    %1412 = vsyncpa [#allocation9], 1
    %1413 = vsyncpa [#allocation12], 1
    %1414 = vsyncpa [#allocation4], 1

</llo_original>
